<compile_context>
chip_gen: v6e
topology: v6e:2x2x1
jax: 0.10.0
libtpu: 0.0.40
codegen_flags: <defaults>
</compile_context>

<pallas_src>
import jax
import jax.numpy as jnp
from jax.experimental import pallas as pl
from jax.experimental.pallas import tpu as pltpu

NEG_SLOPE = 0.2


def _leaky(x):
    return jnp.where(x > 0, x, NEG_SLOPE * x)


def generator_block_kernel(x_ref, d_ref, t1_ref, b1_ref, t2_ref, b2_ref,
                           o_ref, xd_s, h1_s):
    # x_ref : (1, H, W*Cin)         bf16  original-resolution input, channels folded into lanes
    # d_ref : (H2+2, H)             bf16  row nearest-upsample + zero-pad operator (0/1 entries)
    # t1_ref: (3, W*Cin, W2*Cout)   bf16  conv1 width-Toeplitz factors (col upsample + dx + W-pad folded in)
    # b1_ref: (1, W2*Cout)          f32   conv1 bias tiled along W2
    # t2_ref: (3, W2*Cout, W2*Cout) bf16  conv2 width-Toeplitz factors
    # b2_ref: (1, W2*Cout)          f32   conv2 bias tiled along W2
    # o_ref : (1, H2, W2*Cout)      f32   lane-dense output
    # xd_s  : VMEM (H2+2, W*Cin)    f32   row-duplicated + row-padded input
    # h1_s  : VMEM (H2+2, W2*Cout)  f32   row-padded conv1 activation
    H2 = o_ref.shape[1]
    n2 = o_ref.shape[2]

    # Nearest-neighbour x2 along H plus the 1-row zero padding, via one small matmul.
    # Full aligned overwrite of the scratch each step -> "parallel" batch grid is safe.
    xd_s[...] = jnp.dot(d_ref[...], x_ref[0], preferred_element_type=jnp.float32)

    # ---- conv1: 3 row-shifted matmuls against the width-Toeplitz factors (bf16 MXU) ----
    acc1 = jnp.zeros((H2, n2), jnp.float32)
    for dy in range(3):
        acc1 = acc1 + jnp.dot(xd_s[dy:dy + H2, :].astype(jnp.bfloat16), t1_ref[dy],
                              preferred_element_type=jnp.float32)
    a1 = _leaky(acc1 + b1_ref[...])

    # Row-padded conv1 activation for conv2: zero only the two border rows.
    h1_s[0:1, :] = jnp.zeros((1, n2), jnp.float32)
    h1_s[H2 + 1:H2 + 2, :] = jnp.zeros((1, n2), jnp.float32)
    h1_s[1:H2 + 1, :] = a1

    # ---- conv2: 3 row-shifted matmuls ----
    acc2 = jnp.zeros((H2, n2), jnp.float32)
    for dy in range(3):
        acc2 = acc2 + jnp.dot(h1_s[dy:dy + H2, :].astype(jnp.bfloat16), t2_ref[dy],
                              preferred_element_type=jnp.float32)
    o_ref[0] = _leaky(acc2 + b2_ref[...]).astype(o_ref.dtype)


def _width_toeplitz(w_hwio, w_in, w_out, upsample):
    """Per-dy width-Toeplitz factors (3, w_in*Ci, w_out*Co) from HWIO 3x3 weights.

    Folds the dx taps, the width zero-padding and (optionally) the nearest-x2 column
    upsample into the weights, so the kernel only has to shift rows (dy).
    """
    Ci, Co = w_hwio.shape[2], w_hwio.shape[3]
    dx = jnp.arange(3)
    wo = jnp.arange(w_out)
    q = wo[None, :] + dx[:, None] - 1                 # padded (upsampled) input column
    valid = (q >= 0) & (q < w_out)
    src = q // 2 if upsample else q                   # map to stored input column
    src = jnp.clip(src, 0, w_in - 1)
    wi = jnp.arange(w_in)
    mask = valid[:, None, :] & (wi[None, :, None] == src[:, None, :])   # (3, w_in, w_out)
    # t[dy, wi, ci, wo, co] = sum_dx mask[dx, wi, wo] * w[dy, dx, ci, co]
    t = jnp.einsum('xuw,yxio->yuiwo', mask.astype(w_hwio.dtype), w_hwio)
    return t.reshape(3, w_in * Ci, w_out * Co).astype(jnp.bfloat16)


@jax.jit
def generator_block(x_nchw, w1_oihw, b1, w2_oihw, b2):
    """(B, Cin, H, W) -> (B, Cout, 2H, 2W), matching the PyTorch GeneratorBlock."""
    B, Cin, H, W = x_nchw.shape
    Cout = w1_oihw.shape[0]
    H2, W2 = 2 * H, 2 * W
    K1, N2 = W * Cin, W2 * Cout

    # ---- one-time (XLA) operand prep on original-size tensors ----
    # input: NCHW -> (B, H, W*Cin), bf16 (lane-folded, halves per-step input DMA)
    x_f = jnp.transpose(x_nchw, (0, 2, 3, 1)).reshape(B, H, K1).astype(jnp.bfloat16)

    # row nearest-upsample + zero-pad operator (H2+2, H): row p holds x row (p-1)//2
    r = jnp.arange(H2 + 2)
    interior = (r >= 1) & (r <= H2)
    src_row = jnp.clip((r - 1) // 2, 0, H - 1)
    d_op = (interior[:, None] & (jnp.arange(H)[None, :] == src_row[:, None])
            ).astype(jnp.bfloat16)

    # OIHW -> HWIO, then fold into width-Toeplitz factors
    w1_hwio = jnp.transpose(w1_oihw, (2, 3, 1, 0)).astype(jnp.float32)   # (3,3,Cin,Cout)
    w2_hwio = jnp.transpose(w2_oihw, (2, 3, 1, 0)).astype(jnp.float32)   # (3,3,Cout,Cout)
    t1 = _width_toeplitz(w1_hwio, W, W2, upsample=True)    # (3, W*Cin,   W2*Cout)
    t2 = _width_toeplitz(w2_hwio, W2, W2, upsample=False)  # (3, W2*Cout, W2*Cout)
    b1_t = jnp.tile(b1.astype(jnp.float32), W2).reshape(1, N2)
    b2_t = jnp.tile(b2.astype(jnp.float32), W2).reshape(1, N2)

    out = pl.pallas_call(
        generator_block_kernel,
        out_shape=jax.ShapeDtypeStruct((B, H2, N2), jnp.float32),
        grid_spec=pltpu.PrefetchScalarGridSpec(
            num_scalar_prefetch=0,
            grid=(B,),
            in_specs=[
                pl.BlockSpec((1, H, K1), lambda b: (b, 0, 0)),
                pl.BlockSpec((H2 + 2, H), lambda b: (0, 0)),
                pl.BlockSpec((3, K1, N2), lambda b: (0, 0, 0)),
                pl.BlockSpec((1, N2), lambda b: (0, 0)),
                pl.BlockSpec((3, N2, N2), lambda b: (0, 0, 0)),
                pl.BlockSpec((1, N2), lambda b: (0, 0)),
            ],
            out_specs=pl.BlockSpec((1, H2, N2), lambda b: (b, 0, 0)),
            scratch_shapes=[
                pltpu.VMEM((H2 + 2, K1), jnp.float32),
                pltpu.VMEM((H2 + 2, N2), jnp.float32),
            ],
        ),
        compiler_params=pltpu.CompilerParams(dimension_semantics=("parallel",)),
    )(x_f, d_op, t1, b1_t, t2, b2_t)

    # lane-dense (B, H2, W2*Cout) -> (B, Cout, H2, W2)
    return jnp.transpose(out.reshape(B, H2, W2, Cout), (0, 3, 1, 2))


def _reference(x_nchw, w1, b1, w2, b2):
    """Pure-JAX f32 reference mimicking the PyTorch forward (NCHW / OIHW)."""
    xu = jnp.repeat(jnp.repeat(x_nchw, 2, axis=2), 2, axis=3)
    y = jax.lax.conv_general_dilated(
        xu, w1, (1, 1), 'SAME', dimension_numbers=('NCHW', 'OIHW', 'NCHW')
    ) + b1[None, :, None, None]
    y = jnp.where(y > 0, y, NEG_SLOPE * y)
    y = jax.lax.conv_general_dilated(
        y, w2, (1, 1), 'SAME', dimension_numbers=('NCHW', 'OIHW', 'NCHW')
    ) + b2[None, :, None, None]
    return jnp.where(y > 0, y, NEG_SLOPE * y)


if __name__ == "__main__":
    B, Cin, Cout, H, W = 2, 4, 8, 16, 16

    key = jax.random.PRNGKey(0)
    kx, kw1, kb1, kw2, kb2 = jax.random.split(key, 5)

    x = jax.random.normal(kx, (B, Cin, H, W), jnp.float32)
    # PyTorch Conv2d weight layout: OIHW.
    w1 = jax.random.normal(kw1, (Cout, Cin, 3, 3), jnp.float32) * 0.1
    b1 = jax.random.normal(kb1, (Cout,), jnp.float32) * 0.1
    w2 = jax.random.normal(kw2, (Cout, Cout, 3, 3), jnp.float32) * 0.1
    b2 = jax.random.normal(kb2, (Cout,), jnp.float32) * 0.1

    out = generator_block(x, w1, b1, w2, b2)
    out = jax.block_until_ready(out)

    ref = _reference(x, w1, b1, w2, b2)
    assert out.shape == (B, Cout, 2 * H, 2 * W), out.shape
    # bf16 MXU operands -> tolerance loosened vs. the f32 version (per review).
    max_err = float(jnp.max(jnp.abs(out - ref)))
    assert jnp.allclose(out, ref, atol=5e-2, rtol=5e-2), max_err

    print("KERNEL_OK")
</pallas_src>

<mosaic_0001>
module attributes {stable_mosaic.version = 11 : i64} {
  func.func @generator_block_kernel(%arg0: i32, %arg1: memref<1x16x64xbf16, #tpu.memory_space<vmem>>, %arg2: memref<34x16xbf16, #tpu.memory_space<vmem>>, %arg3: memref<3x64x256xbf16, #tpu.memory_space<vmem>>, %arg4: memref<1x256xf32, #tpu.memory_space<vmem>>, %arg5: memref<3x256x256xbf16, #tpu.memory_space<vmem>>, %arg6: memref<1x256xf32, #tpu.memory_space<vmem>>, %arg7: memref<1x32x256xf32, #tpu.memory_space<vmem>>, %arg8: memref<34x64xf32, #tpu.memory_space<vmem>>, %arg9: memref<34x256xf32, #tpu.memory_space<vmem>>) attributes {dimension_semantics = [#tpu.dimension_semantics<parallel>], iteration_bounds = array<i64: 2>, scalar_prefetch = 0 : i64, scratch_operands = 2 : i64, tpu.core_type = #tpu.core_type<tc>, window_params = [{transform_indices = @transform_0, window_bounds = array<i64: 1, 16, 64>}, {pipeline_mode = #tpu.pipeline_mode<synchronous>, transform_indices = @transform_1, window_bounds = array<i64: 34, 16>}, {pipeline_mode = #tpu.pipeline_mode<synchronous>, transform_indices = @transform_2, window_bounds = array<i64: 3, 64, 256>}, {pipeline_mode = #tpu.pipeline_mode<synchronous>, transform_indices = @transform_3, window_bounds = array<i64: 1, 256>}, {pipeline_mode = #tpu.pipeline_mode<synchronous>, transform_indices = @transform_4, window_bounds = array<i64: 3, 256, 256>}, {pipeline_mode = #tpu.pipeline_mode<synchronous>, transform_indices = @transform_5, window_bounds = array<i64: 1, 256>}, {transform_indices = @transform_6, window_bounds = array<i64: 1, 32, 256>}]} {
    %c0 = arith.constant 0 : index
    %c0_0 = arith.constant 0 : index
    %0 = vector.load %arg2[%c0, %c0_0] : memref<34x16xbf16, #tpu.memory_space<vmem>>, vector<34x16xbf16>
    %c0_1 = arith.constant 0 : index
    %c0_2 = arith.constant 0 : index
    %c0_3 = arith.constant 0 : index
    %1 = vector.load %arg1[%c0_1, %c0_2, %c0_3] : memref<1x16x64xbf16, #tpu.memory_space<vmem>>, vector<1x16x64xbf16>
    %2 = vector.shape_cast %1 : vector<1x16x64xbf16> to vector<16x64xbf16>
    %cst = arith.constant dense<0.000000e+00> : vector<34x64xf32>
    %3 = tpu.matmul %0, %2, %cst {dimension_numbers = #tpu.dot_dimension_numbers<[1], [0], [0], [1], [0, 0, 1, 1], [], []>} : vector<34x16xbf16>, vector<16x64xbf16>, vector<34x64xf32> -> vector<34x64xf32>
    %c0_4 = arith.constant 0 : index
    %c0_5 = arith.constant 0 : index
    %4 = vector.load %arg8[%c0_4, %c0_5] : memref<34x64xf32, #tpu.memory_space<vmem>>, vector<34x64xf32>
    tpu.vector_store %arg8[%c0_4, %c0_5], %3 {strides = array<i32>} : memref<34x64xf32, #tpu.memory_space<vmem>>, vector<34x64xf32>,
    %cst_6 = arith.constant 0.000000e+00 : f32
    %5 = vector.broadcast %cst_6 : f32 to vector<32x256xf32>
    %c0_7 = arith.constant 0 : index
    %c0_8 = arith.constant 0 : index
    %6 = vector.load %arg8[%c0_7, %c0_8] : memref<34x64xf32, #tpu.memory_space<vmem>>, vector<32x64xf32>
    %7 = arith.truncf %6 : vector<32x64xf32> to vector<32x64xbf16>
    %c0_9 = arith.constant 0 : index
    %c0_10 = arith.constant 0 : index
    %c0_11 = arith.constant 0 : index
    %8 = vector.load %arg3[%c0_9, %c0_10, %c0_11] : memref<3x64x256xbf16, #tpu.memory_space<vmem>>, vector<1x64x256xbf16>
    %9 = vector.shape_cast %8 : vector<1x64x256xbf16> to vector<64x256xbf16>
    %cst_12 = arith.constant dense<0.000000e+00> : vector<32x256xf32>
    %10 = tpu.matmul %7, %9, %cst_12 {dimension_numbers = #tpu.dot_dimension_numbers<[1], [0], [0], [1], [0, 0, 1, 1], [], []>} : vector<32x64xbf16>, vector<64x256xbf16>, vector<32x256xf32> -> vector<32x256xf32>
    %11 = arith.addf %5, %10 : vector<32x256xf32>
    %c1 = arith.constant 1 : index
    %c0_13 = arith.constant 0 : index
    %12 = vector.load %arg8[%c1, %c0_13] : memref<34x64xf32, #tpu.memory_space<vmem>>, vector<32x64xf32>
    %13 = arith.truncf %12 : vector<32x64xf32> to vector<32x64xbf16>
    %c1_14 = arith.constant 1 : index
    %c0_15 = arith.constant 0 : index
    %c0_16 = arith.constant 0 : index
    %14 = vector.load %arg3[%c1_14, %c0_15, %c0_16] : memref<3x64x256xbf16, #tpu.memory_space<vmem>>, vector<1x64x256xbf16>
    %15 = vector.shape_cast %14 : vector<1x64x256xbf16> to vector<64x256xbf16>
    %cst_17 = arith.constant dense<0.000000e+00> : vector<32x256xf32>
    %16 = tpu.matmul %13, %15, %cst_17 {dimension_numbers = #tpu.dot_dimension_numbers<[1], [0], [0], [1], [0, 0, 1, 1], [], []>} : vector<32x64xbf16>, vector<64x256xbf16>, vector<32x256xf32> -> vector<32x256xf32>
    %17 = arith.addf %11, %16 : vector<32x256xf32>
    %c2 = arith.constant 2 : index
    %c0_18 = arith.constant 0 : index
    %18 = vector.load %arg8[%c2, %c0_18] : memref<34x64xf32, #tpu.memory_space<vmem>>, vector<32x64xf32>
    %19 = arith.truncf %18 : vector<32x64xf32> to vector<32x64xbf16>
    %c2_19 = arith.constant 2 : index
    %c0_20 = arith.constant 0 : index
    %c0_21 = arith.constant 0 : index
    %20 = vector.load %arg3[%c2_19, %c0_20, %c0_21] : memref<3x64x256xbf16, #tpu.memory_space<vmem>>, vector<1x64x256xbf16>
    %21 = vector.shape_cast %20 : vector<1x64x256xbf16> to vector<64x256xbf16>
    %cst_22 = arith.constant dense<0.000000e+00> : vector<32x256xf32>
    %22 = tpu.matmul %19, %21, %cst_22 {dimension_numbers = #tpu.dot_dimension_numbers<[1], [0], [0], [1], [0, 0, 1, 1], [], []>} : vector<32x64xbf16>, vector<64x256xbf16>, vector<32x256xf32> -> vector<32x256xf32>
    %23 = arith.addf %17, %22 : vector<32x256xf32>
    %c0_23 = arith.constant 0 : index
    %c0_24 = arith.constant 0 : index
    %24 = vector.load %arg4[%c0_23, %c0_24] : memref<1x256xf32, #tpu.memory_space<vmem>>, vector<1x256xf32>
    %25 = vector.broadcast %24 : vector<1x256xf32> to vector<32x256xf32>
    %26 = arith.addf %23, %25 : vector<32x256xf32>
    %cst_25 = arith.constant 0.000000e+00 : f32
    %27 = vector.broadcast %cst_25 : f32 to vector<32x256xf32>
    %28 = arith.cmpf ogt, %26, %27 : vector<32x256xf32>
    %cst_26 = arith.constant 2.000000e-01 : f32
    %29 = vector.broadcast %cst_26 : f32 to vector<32x256xf32>
    %30 = arith.mulf %29, %26 : vector<32x256xf32>
    %31 = arith.select %28, %26, %30 : vector<32x256xi1>, vector<32x256xf32>
    %cst_27 = arith.constant 0.000000e+00 : f32
    %32 = vector.broadcast %cst_27 : f32 to vector<1x256xf32>
    %c0_28 = arith.constant 0 : index
    %c0_29 = arith.constant 0 : index
    %33 = vector.load %arg9[%c0_28, %c0_29] : memref<34x256xf32, #tpu.memory_space<vmem>>, vector<1x256xf32>
    tpu.vector_store %arg9[%c0_28, %c0_29], %32 {strides = array<i32>} : memref<34x256xf32, #tpu.memory_space<vmem>>, vector<1x256xf32>,
    %cst_30 = arith.constant 0.000000e+00 : f32
    %34 = vector.broadcast %cst_30 : f32 to vector<1x256xf32>
    %c33 = arith.constant 33 : index
    %c0_31 = arith.constant 0 : index
    %35 = vector.load %arg9[%c33, %c0_31] : memref<34x256xf32, #tpu.memory_space<vmem>>, vector<1x256xf32>
    tpu.vector_store %arg9[%c33, %c0_31], %34 {strides = array<i32>} : memref<34x256xf32, #tpu.memory_space<vmem>>, vector<1x256xf32>,
    %c1_32 = arith.constant 1 : index
    %c0_33 = arith.constant 0 : index
    %36 = vector.load %arg9[%c1_32, %c0_33] : memref<34x256xf32, #tpu.memory_space<vmem>>, vector<32x256xf32>
    tpu.vector_store %arg9[%c1_32, %c0_33], %31 {strides = array<i32>} : memref<34x256xf32, #tpu.memory_space<vmem>>, vector<32x256xf32>,
    %cst_34 = arith.constant 0.000000e+00 : f32
    %37 = vector.broadcast %cst_34 : f32 to vector<32x256xf32>
    %c0_35 = arith.constant 0 : index
    %c0_36 = arith.constant 0 : index
    %38 = vector.load %arg9[%c0_35, %c0_36] : memref<34x256xf32, #tpu.memory_space<vmem>>, vector<32x256xf32>
    %39 = arith.truncf %38 : vector<32x256xf32> to vector<32x256xbf16>
    %c0_37 = arith.constant 0 : index
    %c0_38 = arith.constant 0 : index
    %c0_39 = arith.constant 0 : index
    %40 = vector.load %arg5[%c0_37, %c0_38, %c0_39] : memref<3x256x256xbf16, #tpu.memory_space<vmem>>, vector<1x256x256xbf16>
    %41 = vector.shape_cast %40 : vector<1x256x256xbf16> to vector<256x256xbf16>
    %cst_40 = arith.constant dense<0.000000e+00> : vector<32x256xf32>
    %42 = tpu.matmul %39, %41, %cst_40 {dimension_numbers = #tpu.dot_dimension_numbers<[1], [0], [0], [1], [0, 0, 1, 1], [], []>} : vector<32x256xbf16>, vector<256x256xbf16>, vector<32x256xf32> -> vector<32x256xf32>
    %43 = arith.addf %37, %42 : vector<32x256xf32>
    %c1_41 = arith.constant 1 : index
    %c0_42 = arith.constant 0 : index
    %44 = vector.load %arg9[%c1_41, %c0_42] : memref<34x256xf32, #tpu.memory_space<vmem>>, vector<32x256xf32>
    %45 = arith.truncf %44 : vector<32x256xf32> to vector<32x256xbf16>
    %c1_43 = arith.constant 1 : index
    %c0_44 = arith.constant 0 : index
    %c0_45 = arith.constant 0 : index
    %46 = vector.load %arg5[%c1_43, %c0_44, %c0_45] : memref<3x256x256xbf16, #tpu.memory_space<vmem>>, vector<1x256x256xbf16>
    %47 = vector.shape_cast %46 : vector<1x256x256xbf16> to vector<256x256xbf16>
    %cst_46 = arith.constant dense<0.000000e+00> : vector<32x256xf32>
    %48 = tpu.matmul %45, %47, %cst_46 {dimension_numbers = #tpu.dot_dimension_numbers<[1], [0], [0], [1], [0, 0, 1, 1], [], []>} : vector<32x256xbf16>, vector<256x256xbf16>, vector<32x256xf32> -> vector<32x256xf32>
    %49 = arith.addf %43, %48 : vector<32x256xf32>
    %c2_47 = arith.constant 2 : index
    %c0_48 = arith.constant 0 : index
    %50 = vector.load %arg9[%c2_47, %c0_48] : memref<34x256xf32, #tpu.memory_space<vmem>>, vector<32x256xf32>
    %51 = arith.truncf %50 : vector<32x256xf32> to vector<32x256xbf16>
    %c2_49 = arith.constant 2 : index
    %c0_50 = arith.constant 0 : index
    %c0_51 = arith.constant 0 : index
    %52 = vector.load %arg5[%c2_49, %c0_50, %c0_51] : memref<3x256x256xbf16, #tpu.memory_space<vmem>>, vector<1x256x256xbf16>
    %53 = vector.shape_cast %52 : vector<1x256x256xbf16> to vector<256x256xbf16>
    %cst_52 = arith.constant dense<0.000000e+00> : vector<32x256xf32>
    %54 = tpu.matmul %51, %53, %cst_52 {dimension_numbers = #tpu.dot_dimension_numbers<[1], [0], [0], [1], [0, 0, 1, 1], [], []>} : vector<32x256xbf16>, vector<256x256xbf16>, vector<32x256xf32> -> vector<32x256xf32>
    %55 = arith.addf %49, %54 : vector<32x256xf32>
    %c0_53 = arith.constant 0 : index
    %c0_54 = arith.constant 0 : index
    %56 = vector.load %arg6[%c0_53, %c0_54] : memref<1x256xf32, #tpu.memory_space<vmem>>, vector<1x256xf32>
    %57 = vector.broadcast %56 : vector<1x256xf32> to vector<32x256xf32>
    %58 = arith.addf %55, %57 : vector<32x256xf32>
    %cst_55 = arith.constant 0.000000e+00 : f32
    %59 = vector.broadcast %cst_55 : f32 to vector<32x256xf32>
    %60 = arith.cmpf ogt, %58, %59 : vector<32x256xf32>
    %cst_56 = arith.constant 2.000000e-01 : f32
    %61 = vector.broadcast %cst_56 : f32 to vector<32x256xf32>
    %62 = arith.mulf %61, %58 : vector<32x256xf32>
    %63 = arith.select %60, %58, %62 : vector<32x256xi1>, vector<32x256xf32>
    %c0_57 = arith.constant 0 : index
    %c0_58 = arith.constant 0 : index
    %c0_59 = arith.constant 0 : index
    %64 = vector.load %arg7[%c0_57, %c0_58, %c0_59] : memref<1x32x256xf32, #tpu.memory_space<vmem>>, vector<1x32x256xf32>
    %65 = vector.shape_cast %64 : vector<1x32x256xf32> to vector<32x256xf32>
    %66 = vector.shape_cast %63 : vector<32x256xf32> to vector<1x32x256xf32>
    tpu.vector_store %arg7[%c0_57, %c0_58, %c0_59], %66 {strides = array<i32>} : memref<1x32x256xf32, #tpu.memory_space<vmem>>, vector<1x32x256xf32>,
    return
  }
  func.func @transform_0(%arg0: i32) -> (i32, i32, i32) {
    %c0_i32 = arith.constant 0 : i32
    %c0_i32_0 = arith.constant 0 : i32
    %c0_i32_1 = arith.constant 0 : i32
    return %arg0, %c0_i32, %c0_i32_0 : i32, i32, i32
  }
  func.func @transform_1(%arg0: i32) -> (i32, i32) {
    %c0_i32 = arith.constant 0 : i32
    %c0_i32_0 = arith.constant 0 : i32
    %c0_i32_1 = arith.constant 0 : i32
    return %c0_i32, %c0_i32_0 : i32, i32
  }
  func.func @transform_2(%arg0: i32) -> (i32, i32, i32) {
    %c0_i32 = arith.constant 0 : i32
    %c0_i32_0 = arith.constant 0 : i32
    %c0_i32_1 = arith.constant 0 : i32
    %c0_i32_2 = arith.constant 0 : i32
    return %c0_i32, %c0_i32_0, %c0_i32_1 : i32, i32, i32
  }
  func.func @transform_3(%arg0: i32) -> (i32, i32) {
    %c0_i32 = arith.constant 0 : i32
    %c0_i32_0 = arith.constant 0 : i32
    %c0_i32_1 = arith.constant 0 : i32
    return %c0_i32, %c0_i32_0 : i32, i32
  }
  func.func @transform_4(%arg0: i32) -> (i32, i32, i32) {
    %c0_i32 = arith.constant 0 : i32
    %c0_i32_0 = arith.constant 0 : i32
    %c0_i32_1 = arith.constant 0 : i32
    %c0_i32_2 = arith.constant 0 : i32
    return %c0_i32, %c0_i32_0, %c0_i32_1 : i32, i32, i32
  }
  func.func @transform_5(%arg0: i32) -> (i32, i32) {
    %c0_i32 = arith.constant 0 : i32
    %c0_i32_0 = arith.constant 0 : i32
    %c0_i32_1 = arith.constant 0 : i32
    return %c0_i32, %c0_i32_0 : i32, i32
  }
  func.func @transform_6(%arg0: i32) -> (i32, i32, i32) {
    %c0_i32 = arith.constant 0 : i32
    %c0_i32_0 = arith.constant 0 : i32
    %c0_i32_1 = arith.constant 0 : i32
    return %arg0, %c0_i32, %c0_i32_0 : i32, i32, i32
  }
}

</mosaic_0001>

<llo_original>
// kernel: tile.13
$region0: #{tile.13}
  #allocation0 [shape = 's32[1]{0}', space=sflag, size = 0x4, scoped, tag = 'scoped memory for tile.13']
  %s0 = inlined_call_operand.vmem [shape: f32[8], index: 0, kind: input, shape index: {}]
  %s1 = inlined_call_operand.vmem [shape: f32[32,8], index: 1, kind: output, shape index: {}]
  // Predicated region
  $region2: #{tile.13} parent=0 // pred_check
    _
  $region3: #{tile.13} parent=0 // pred_check_branch
    %3 = sbr.rel (0) target = $region5
  $region4: #{tile.13} parent=0 // pred_region
    _
  $region5: #{tile.13} parent=0 // pred_fallthru
    _
  %v4 = vld [vmem:[%s0] ss:$0 sm:$0xff]
  %5 = vst [vmem:[%s1] sm:$0xff] %v4
  %s6 = scalar_lea.vmem %s1, 8
  %7 = vst [vmem:[%s6] sm:$0xff] %v4
  %s8 = scalar_lea.vmem %s1, 16
  %9 = vst [vmem:[%s8] sm:$0xff] %v4
  %s10 = scalar_lea.vmem %s1, 24
  %11 = vst [vmem:[%s10] sm:$0xff] %v4

// kernel: tile.14
$region0: #{tile.14}
  %s0 = inlined_call_operand.vmem [shape: f32[32,8], index: 0, kind: input, shape index: {}]
  %s1 = inlined_call_operand.vmem [shape: f32[1,256], index: 1, kind: output, shape index: {}]
  $region1: #{tile.14} parent=0
    #allocation0 [shape = 'u8[8192]{0}', space=vmem, size = 0x2000, scoped, tag = 'scoped mem for output reshape']
    %s2 = smov 3
    %v3 = vld [vmem:[%s0] ss:$16 sm:%s2]
    %vm4 = vcmask 64512
    %5 = vst.msk [vmem:[#allocation0] ss:$8 sm:$0x3] %vm4, %v3
    %s6 = scalar_lea.vmem %s0, 15
    %s7 = smov 3
    %v8 = vld [vmem:[%s6] ss:$16 sm:%s7]
    %9 = vrot.lane.b32.xlu0 %v8, 120
    %v10 = vpop.permute.xlu0 %9
    %vm11 = vcmask 1048512
    %12 = vst.msk [vmem:[#allocation0] ss:$8 sm:$0x3] %vm11, %v10
    %s13 = scalar_lea.vmem %s0, 14
    %s14 = smov 3
    %v15 = vld [vmem:[%s13] ss:$16 sm:%s14]
    %16 = vrot.lane.b32.xlu0 %v15, 112
    %v17 = vpop.permute.xlu0 %16
    %vm18 = vcmask 982912
    %19 = vst.msk [vmem:[#allocation0] ss:$8 sm:$0x3] %vm18, %v17
    %s20 = scalar_lea.vmem %s0, 13
    %s21 = smov 3
    %v22 = vld [vmem:[%s20] ss:$16 sm:%s21]
    %23 = vrot.lane.b32.xlu0 %v22, 104
    %v24 = vpop.permute.xlu0 %23
    %vm25 = vcmask 917312
    %26 = vst.msk [vmem:[#allocation0] ss:$8 sm:$0x3] %vm25, %v24
    %s27 = scalar_lea.vmem %s0, 12
    %s28 = smov 3
    %v29 = vld [vmem:[%s27] ss:$16 sm:%s28]
    %30 = vrot.lane.b32.xlu0 %v29, 96
    %v31 = vpop.permute.xlu0 %30
    %vm32 = vcmask 851712
    %33 = vst.msk [vmem:[#allocation0] ss:$8 sm:$0x3] %vm32, %v31
    %s34 = scalar_lea.vmem %s0, 11
    %s35 = smov 3
    %v36 = vld [vmem:[%s34] ss:$16 sm:%s35]
    %37 = vrot.lane.b32.xlu0 %v36, 88
    %v38 = vpop.permute.xlu0 %37
    %vm39 = vcmask 786112
    %40 = vst.msk [vmem:[#allocation0] ss:$8 sm:$0x3] %vm39, %v38
    %s41 = scalar_lea.vmem %s0, 10
    %s42 = smov 3
    %v43 = vld [vmem:[%s41] ss:$16 sm:%s42]
    %44 = vrot.lane.b32.xlu0 %v43, 80
    %v45 = vpop.permute.xlu0 %44
    %vm46 = vcmask 720512
    %47 = vst.msk [vmem:[#allocation0] ss:$8 sm:$0x3] %vm46, %v45
    %s48 = scalar_lea.vmem %s0, 9
    %s49 = smov 3
    %v50 = vld [vmem:[%s48] ss:$16 sm:%s49]
    %51 = vrot.lane.b32.xlu0 %v50, 72
    %v52 = vpop.permute.xlu0 %51
    %vm53 = vcmask 654912
    %54 = vst.msk [vmem:[#allocation0] ss:$8 sm:$0x3] %vm53, %v52
    %s55 = scalar_lea.vmem %s0, 8
    %s56 = smov 3
    %v57 = vld [vmem:[%s55] ss:$16 sm:%s56]
    %58 = vrot.lane.b32.xlu0 %v57, 64
    %v59 = vpop.permute.xlu0 %58
    %vm60 = vcmask 589312
    %61 = vst.msk [vmem:[#allocation0] ss:$8 sm:$0x3] %vm60, %v59
    %s62 = scalar_lea.vmem %s0, 7
    %s63 = smov 3
    %v64 = vld [vmem:[%s62] ss:$16 sm:%s63]
    %65 = vrot.lane.b32.xlu0 %v64, 56
    %v66 = vpop.permute.xlu0 %65
    %vm67 = vcmask 523712
    %68 = vst.msk [vmem:[#allocation0] ss:$8 sm:$0x3] %vm67, %v66
    %s69 = scalar_lea.vmem %s0, 6
    %s70 = smov 3
    %v71 = vld [vmem:[%s69] ss:$16 sm:%s70]
    %72 = vrot.lane.b32.xlu0 %v71, 48
    %v73 = vpop.permute.xlu0 %72
    %vm74 = vcmask 458112
    %75 = vst.msk [vmem:[#allocation0] ss:$8 sm:$0x3] %vm74, %v73
    %s76 = scalar_lea.vmem %s0, 5
    %s77 = smov 3
    %v78 = vld [vmem:[%s76] ss:$16 sm:%s77]
    %79 = vrot.lane.b32.xlu0 %v78, 40
    %v80 = vpop.permute.xlu0 %79
    %vm81 = vcmask 392512
    %82 = vst.msk [vmem:[#allocation0] ss:$8 sm:$0x3] %vm81, %v80
    %s83 = scalar_lea.vmem %s0, 4
    %s84 = smov 3
    %v85 = vld [vmem:[%s83] ss:$16 sm:%s84]
    %86 = vrot.lane.b32.xlu0 %v85, 32
    %v87 = vpop.permute.xlu0 %86
    %vm88 = vcmask 326912
    %89 = vst.msk [vmem:[#allocation0] ss:$8 sm:$0x3] %vm88, %v87
    %s90 = scalar_lea.vmem %s0, 3
    %s91 = smov 3
    %v92 = vld [vmem:[%s90] ss:$16 sm:%s91]
    %93 = vrot.lane.b32.xlu0 %v92, 24
    %v94 = vpop.permute.xlu0 %93
    %vm95 = vcmask 261312
    %96 = vst.msk [vmem:[#allocation0] ss:$8 sm:$0x3] %vm95, %v94
    %s97 = scalar_lea.vmem %s0, 2
    %s98 = smov 3
    %v99 = vld [vmem:[%s97] ss:$16 sm:%s98]
    %100 = vrot.lane.b32.xlu0 %v99, 16
    %v101 = vpop.permute.xlu0 %100
    %vm102 = vcmask 195712
    %103 = vst.msk [vmem:[#allocation0] ss:$8 sm:$0x3] %vm102, %v101
    %s104 = scalar_lea.vmem %s0, 1
    %s105 = smov 3
    %v106 = vld [vmem:[%s104] ss:$16 sm:%s105]
    %107 = vrot.lane.b32.xlu0 %v106, 8
    %v108 = vpop.permute.xlu0 %107
    %vm109 = vcmask 130112
    %110 = vst.msk [vmem:[#allocation0] ss:$8 sm:$0x3] %vm109, %v108
    %s112 = sshll.u32 1, 1
    %s113 = ssub.s32 %s112, 1
    %v115 = vld [vmem:[#allocation0] sm:%s113]
    %s116 = sshll.u32 1, 1
    %s117 = ssub.s32 %s116, 1
    %118 = vst [vmem:[%s1] sm:%s117] %v115
    %s119 = scalar_lea.vmem [#allocation0], 8
    %v120 = vld [vmem:[%s119] sm:%s113]
    %s121 = sshll.u32 1, 1
    %s122 = ssub.s32 %s121, 1
    %s123 = scalar_lea.vmem %s1, 1
    %124 = vst [vmem:[%s123] sm:%s122] %v120

// kernel: generator_block.1
$region0: #{generator_block.1}
  #allocation0 [shape = 'u32[]', space=smem, size = 0x4, offset = 0x4, fixed_abs, tag = 'smem constant byte address 0x4 - core index']
  #allocation1 [shape = 'u32[144,128]{1,0:T(1,128)}', space=vmem, size = 0x12000, scoped, tag = 'internal scratch']
  #allocation2 [shape = 'f32[34,64]{1,0:T(8,128)}', space=vmem, size = 0x5000, scoped, tag = 'scratch operand']
  #allocation3 [shape = 'f32[34,256]{1,0:T(8,128)}', space=vmem, size = 0xa000, scoped, tag = 'scratch operand']
  %s0 = inlined_call_operand.vmem [shape: bf16[2,16,64], index: 0, kind: input, shape index: {}]
  %s1 = inlined_call_operand.vmem [shape: bf16[34,16], index: 1, kind: input, shape index: {}]
  %s2 = inlined_call_operand.vmem [shape: bf16[3,64,256], index: 2, kind: input, shape index: {}]
  %s3 = inlined_call_operand.vmem [shape: f32[1,256], index: 3, kind: input, shape index: {}]
  %s4 = inlined_call_operand.vmem [shape: bf16[3,256,256], index: 4, kind: input, shape index: {}]
  %s5 = inlined_call_operand.vmem [shape: f32[1,256], index: 5, kind: input, shape index: {}]
  %s6 = inlined_call_operand.vmem [shape: f32[2,32,256], index: 6, kind: output, shape index: {}]
  %s7 = sld [smem:[#allocation0]]
  $region57: #{generator_block.1} parent=0
    _
  %s9 = ssub.s32 1, %s7
  %s10 = scalar_select 0, %s9, %s7
  loop: start=0, step=1, limit=4
  $region2: #{generator_block.1} parent=0 // loop_pre_header
    _
  $region3: #{generator_block.1} parent=0 // loop_header
    %s12 = sphi 0, %s16
    %p13 = scmp.ge.s32.totalorder %s12, 4
    %s22 = sphi 0, %s24
    %s25 = sphi 0, %s22
    %s26 = sphi 0, %s25
    %s42 = sphi 0, %s26
    %s46 = sphi 0, %s46
    %s48 = sphi 0, %s46
    %s49 = sphi 0, %s48
    %s63 = sphi 0, %s49
    %s67 = sphi 0, %s67
    %s69 = sphi 0, %s67
    %s70 = sphi 0, %s69
    %s84 = sphi 0, %s70
    %s88 = sphi 0, %s88
    %s90 = sphi 0, %s88
    %s91 = sphi 0, %s90
    %s105 = sphi 0, %s91
    %s109 = sphi 0, %s109
    %s111 = sphi 0, %s109
    %s112 = sphi 0, %s111
    %s126 = sphi 0, %s112
    %s130 = sphi 0, %s130
    %s132 = sphi 0, %s130
    %s133 = sphi 0, %s132
    %s147 = sphi 0, %s133
    %s153 = sphi 0, %s155
    %s156 = sphi 0, %s153
    %s157 = sphi 0, %s156
    %s173 = sphi 0, %s157
  $region4: #{generator_block.1} parent=0 // loop_header_branch
    %15 = sbr.rel (%p13) target = $region8
  $region5: #{generator_block.1} parent=0 // loop_body
    %s17 = ssub.s32 %s12, 1
    %s18 = ssub.s32 %s12, 2
    %s19 = sadd.s32 %s12, 1
    %s20 = ssub.s32 %s12, %s19
    %p21 = scmp.eq.s32.totalorder %s20, 0
    %s23 = sadd.s32 %s22, 1
    %s24 = scalar_select %p21, %s22, %s23
    %p27 = pneg %p21
    %p28 = scmp.eq.s32.totalorder %s12, 1
    %p29 = por %p27, %p28
    %p30 = scmp.ne.s32.totalorder %s22, %s25
    %p31 = scmp.eq.s32.totalorder %s12, 0
    %p32 = por %p30, %p31
    %p33 = scmp.ne.s32.totalorder %s22, %s25
    %p34 = scmp.eq.s32.totalorder %s17, 1
    %p35 = por %p33, %p34
    %p36 = scmp.ne.s32.totalorder %s25, %s26
    %p37 = scmp.eq.s32.totalorder %s17, 0
    %p38 = por %p36, %p37
    %p39 = scmp.ne.s32.totalorder %s25, %s26
    %p40 = scmp.eq.s32.totalorder %s18, 1
    %p41 = por %p39, %p40
    %p43 = scmp.ne.s32.totalorder %s26, %s42
    %p44 = scmp.eq.s32.totalorder %s18, 0
    %p45 = por %p43, %p44
    %s47 = sadd.s32 %s46, 1
    %p50 = scmp.eq.s32.totalorder %s12, 1
    %p51 = scmp.ne.s32.totalorder %s46, %s48
    %p52 = scmp.eq.s32.totalorder %s12, 0
    %p53 = por %p51, %p52
    %p54 = scmp.ne.s32.totalorder %s46, %s48
    %p55 = scmp.eq.s32.totalorder %s17, 1
    %p56 = por %p54, %p55
    %p57 = scmp.ne.s32.totalorder %s48, %s49
    %p58 = scmp.eq.s32.totalorder %s17, 0
    %p59 = por %p57, %p58
    %p60 = scmp.ne.s32.totalorder %s48, %s49
    %p61 = scmp.eq.s32.totalorder %s18, 1
    %p62 = por %p60, %p61
    %p64 = scmp.ne.s32.totalorder %s49, %s63
    %p65 = scmp.eq.s32.totalorder %s18, 0
    %p66 = por %p64, %p65
    %s68 = sadd.s32 %s67, 1
    %p71 = scmp.eq.s32.totalorder %s12, 1
    %p72 = scmp.ne.s32.totalorder %s67, %s69
    %p73 = scmp.eq.s32.totalorder %s12, 0
    %p74 = por %p72, %p73
    %p75 = scmp.ne.s32.totalorder %s67, %s69
    %p76 = scmp.eq.s32.totalorder %s17, 1
    %p77 = por %p75, %p76
    %p78 = scmp.ne.s32.totalorder %s69, %s70
    %p79 = scmp.eq.s32.totalorder %s17, 0
    %p80 = por %p78, %p79
    %p81 = scmp.ne.s32.totalorder %s69, %s70
    %p82 = scmp.eq.s32.totalorder %s18, 1
    %p83 = por %p81, %p82
    %p85 = scmp.ne.s32.totalorder %s70, %s84
    %p86 = scmp.eq.s32.totalorder %s18, 0
    %p87 = por %p85, %p86
    %s89 = sadd.s32 %s88, 1
    %p92 = scmp.eq.s32.totalorder %s12, 1
    %p93 = scmp.ne.s32.totalorder %s88, %s90
    %p94 = scmp.eq.s32.totalorder %s12, 0
    %p95 = por %p93, %p94
    %p96 = scmp.ne.s32.totalorder %s88, %s90
    %p97 = scmp.eq.s32.totalorder %s17, 1
    %p98 = por %p96, %p97
    %p99 = scmp.ne.s32.totalorder %s90, %s91
    %p100 = scmp.eq.s32.totalorder %s17, 0
    %p101 = por %p99, %p100
    %p102 = scmp.ne.s32.totalorder %s90, %s91
    %p103 = scmp.eq.s32.totalorder %s18, 1
    %p104 = por %p102, %p103
    %p106 = scmp.ne.s32.totalorder %s91, %s105
    %p107 = scmp.eq.s32.totalorder %s18, 0
    %p108 = por %p106, %p107
    %s110 = sadd.s32 %s109, 1
    %p113 = scmp.eq.s32.totalorder %s12, 1
    %p114 = scmp.ne.s32.totalorder %s109, %s111
    %p115 = scmp.eq.s32.totalorder %s12, 0
    %p116 = por %p114, %p115
    %p117 = scmp.ne.s32.totalorder %s109, %s111
    %p118 = scmp.eq.s32.totalorder %s17, 1
    %p119 = por %p117, %p118
    %p120 = scmp.ne.s32.totalorder %s111, %s112
    %p121 = scmp.eq.s32.totalorder %s17, 0
    %p122 = por %p120, %p121
    %p123 = scmp.ne.s32.totalorder %s111, %s112
    %p124 = scmp.eq.s32.totalorder %s18, 1
    %p125 = por %p123, %p124
    %p127 = scmp.ne.s32.totalorder %s112, %s126
    %p128 = scmp.eq.s32.totalorder %s18, 0
    %p129 = por %p127, %p128
    %s131 = sadd.s32 %s130, 1
    %p134 = scmp.eq.s32.totalorder %s12, 1
    %p135 = scmp.ne.s32.totalorder %s130, %s132
    %p136 = scmp.eq.s32.totalorder %s12, 0
    %p137 = por %p135, %p136
    %p138 = scmp.ne.s32.totalorder %s130, %s132
    %p139 = scmp.eq.s32.totalorder %s17, 1
    %p140 = por %p138, %p139
    %p141 = scmp.ne.s32.totalorder %s132, %s133
    %p142 = scmp.eq.s32.totalorder %s17, 0
    %p143 = por %p141, %p142
    %p144 = scmp.ne.s32.totalorder %s132, %s133
    %p145 = scmp.eq.s32.totalorder %s18, 1
    %p146 = por %p144, %p145
    %p148 = scmp.ne.s32.totalorder %s133, %s147
    %p149 = scmp.eq.s32.totalorder %s18, 0
    %p150 = por %p148, %p149
    %s151 = ssub.s32 %s12, %s19
    %p152 = scmp.eq.s32.totalorder %s151, 0
    %s154 = sadd.s32 %s153, 1
    %s155 = scalar_select %p152, %s153, %s154
    %p158 = pneg %p152
    %p159 = scmp.eq.s32.totalorder %s12, 1
    %p160 = por %p158, %p159
    %p161 = scmp.ne.s32.totalorder %s153, %s156
    %p162 = scmp.eq.s32.totalorder %s12, 0
    %p163 = por %p161, %p162
    %p164 = scmp.ne.s32.totalorder %s153, %s156
    %p165 = scmp.eq.s32.totalorder %s17, 1
    %p166 = por %p164, %p165
    %p167 = scmp.ne.s32.totalorder %s156, %s157
    %p168 = scmp.eq.s32.totalorder %s17, 0
    %p169 = por %p167, %p168
    %p170 = scmp.ne.s32.totalorder %s156, %s157
    %p171 = scmp.eq.s32.totalorder %s18, 1
    %p172 = por %p170, %p171
    %p174 = scmp.ne.s32.totalorder %s157, %s173
    %p175 = scmp.eq.s32.totalorder %s18, 0
    %p176 = por %p174, %p175
    %p177 = scmp.le.s32.totalorder 1, %s12
    %p178 = scmp.lt.s32.totalorder %s12, 3
    %p179 = pnand %p177, %p178
    %p180 = pneg %p179
    // Predicated region
    $region9: #{generator_block.1} parent=5 // pred_check
      _
    $region10: #{generator_block.1} parent=5 // pred_check_branch
      %182 = sbr.rel (%p179) target = $region12
    $region11: #{generator_block.1} parent=5 // pred_region
      %s183 = ssub.s32 %s12, 1
      // Predicated region
      $region13: #{generator_block.1} parent=11 // pred_check
        %p184 = pneg %p59
      $region14: #{generator_block.1} parent=11 // pred_check_branch
        %186 = sbr.rel (%p184) target = $region16
      $region15: #{generator_block.1} parent=11 // pred_region
        _
      $region16: #{generator_block.1} parent=11 // pred_fallthru
        _
      // Predicated region
      $region17: #{generator_block.1} parent=11 // pred_check
        %p187 = pneg %p80
      $region18: #{generator_block.1} parent=11 // pred_check_branch
        %189 = sbr.rel (%p187) target = $region20
      $region19: #{generator_block.1} parent=11 // pred_region
        _
      $region20: #{generator_block.1} parent=11 // pred_fallthru
        _
      // Predicated region
      $region21: #{generator_block.1} parent=11 // pred_check
        %p190 = pneg %p101
      $region22: #{generator_block.1} parent=11 // pred_check_branch
        %192 = sbr.rel (%p190) target = $region24
      $region23: #{generator_block.1} parent=11 // pred_region
        _
      $region24: #{generator_block.1} parent=11 // pred_fallthru
        _
      // Predicated region
      $region25: #{generator_block.1} parent=11 // pred_check
        %p193 = pneg %p122
      $region26: #{generator_block.1} parent=11 // pred_check_branch
        %195 = sbr.rel (%p193) target = $region28
      $region27: #{generator_block.1} parent=11 // pred_region
        _
      $region28: #{generator_block.1} parent=11 // pred_fallthru
        _
      // Predicated region
      $region29: #{generator_block.1} parent=11 // pred_check
        %p196 = pneg %p143
      $region30: #{generator_block.1} parent=11 // pred_check_branch
        %198 = sbr.rel (%p196) target = $region32
      $region31: #{generator_block.1} parent=11 // pred_region
        _
      $region32: #{generator_block.1} parent=11 // pred_fallthru
        _
    $region12: #{generator_block.1} parent=5 // pred_fallthru
      _
    %p199 = scmp.lt.s32.totalorder %s12, 2
    // Predicated region
    $region33: #{generator_block.1} parent=5 // pred_check
      %p200 = pneg %p199
    $region34: #{generator_block.1} parent=5 // pred_check_branch
      %202 = sbr.rel (%p200) target = $region36
    $region35: #{generator_block.1} parent=5 // pred_region
      // Predicated region
      $region37: #{generator_block.1} parent=35 // pred_check
        %p203 = pneg %p32
      $region38: #{generator_block.1} parent=35 // pred_check_branch
        %205 = sbr.rel (%p203) target = $region40
      $region39: #{generator_block.1} parent=35 // pred_region
        %p206 = scmp.lt.s32.totalorder %s12, 1
        %s207 = scalar_select %p206, %s12, 1
        %s208 = smul.addr %s207, 2
        %s209 = smul.addr %s208, 4
        %s210 = scalar_lea.vmem %s0, %s209
      $region40: #{generator_block.1} parent=35 // pred_fallthru
        _
    $region36: #{generator_block.1} parent=5 // pred_fallthru
      _
    %p211 = scmp.le.s32.totalorder 1, %s12
    %p212 = scmp.lt.s32.totalorder %s12, 3
    %p213 = pnand %p211, %p212
    %p214 = pneg %p213
    // Predicated region
    $region41: #{generator_block.1} parent=5 // pred_check
      _
    $region42: #{generator_block.1} parent=5 // pred_check_branch
      %216 = sbr.rel (%p213) target = $region44
    $region43: #{generator_block.1} parent=5 // pred_region
      %s217 = ssub.s32 %s12, 1
      %p218 = scmp.lt.s32.totalorder %s17, 1
      %s219 = scalar_select %p218, %s17, 1
      %s220 = smul.addr %s219, 2
      %s221 = smul.addr %s220, 4
      %s222 = scalar_lea.vmem %s0, %s221
      %p223 = pneg %p38
      %p224 = pneg %p35
      %p225 = pneg %p59
      %p226 = pneg %p56
      %p227 = pneg %p80
      %p228 = pneg %p77
      %p229 = pneg %p101
      %p230 = pneg %p98
      %p231 = pneg %p122
      %p232 = pneg %p119
      %p233 = pneg %p143
      %p234 = pneg %p140
      %p235 = pneg %p169
      %p236 = pneg %p166
      %p237 = scmp.lt.s32.totalorder %s17, 1
      %s238 = scalar_select %p237, %s17, 1
      %s239 = smul.addr %s238, 8
      %s240 = smul.addr %s239, 8
      %s241 = scalar_lea.vmem %s6, %s240
      %p242 = scmp.lt.s32.totalorder %s17, 1
      %s243 = scalar_select %p242, %s17, 1
      %s244 = smul.addr %s243, 2
      %s245 = smul.addr %s244, 4
      %s246 = scalar_lea.vmem %s0, %s245
      %p247 = scmp.lt.s32.totalorder %s17, 1
      %s248 = scalar_select %p247, %s17, 1
      %s249 = smul.addr %s248, 8
      %s250 = smul.addr %s249, 8
      %s251 = scalar_lea.vmem %s6, %s250
      %v253 = vld [vmem:[%s1] sm:$0xf]
      %v254 = vld [vmem:[%s1 + $0x4] sm:$0xf]
      %v255 = vld [vmem:[%s1 + $0x8] sm:$0xf]
      %v256 = vld [vmem:[%s1 + $0xc] sm:$0xf]
      %v257 = vld [vmem:[%s1 + $0x10] sm:$0x1]
      %v258 = vld [vmem:[%s246] sm:$0xf]
      %v259 = vld [vmem:[%s246 + $0x4] sm:$0xf]
      %v265 = vunpack.c.l.b16 %v253
      %v266 = vunpack.c.l.b16 %v254
      %v267 = vunpack.c.l.b16 %v255
      %v268 = vunpack.c.l.b16 %v256
      %v269 = vunpack.c.l.b16 %v257
      %v270 = vpack.c.b16 %v266, %v265
      %v271 = vpack.c.b16 %v268, %v267
      %v272 = vpack.c.b16 %v269, %v269
      %v275 = vunpack.c.l.b16 %v258
      %v276 = vunpack.c.l.b16 %v259
      %v277 = vpack.c.b16 %v276, %v275
      %vm279 = vcmask 130048
      %v281 = vsel %vm279, %v270, 0
      %v284 = vsel %vm279, %v271, 0
      %v287 = vsel %vm279, %v272, 0
      %289 = vmatprep.subr.bf16.mxu0 0
      %290 = vmatpush1.bf16.msra.mxu0 0
      %291 = vmatprep.subr.bf16.mxu0 0
      %292 = vmatpush1.bf16.msra.mxu0 0
      %293 = vmatprep.subr.bf16.mxu0 0
      %294 = vmatpush1.bf16.msra.mxu0 0
      %295 = vmatprep.subr.bf16.mxu0 0
      %296 = vmatpush1.bf16.msra.mxu0 0
      %297 = vmatprep.subr.bf16.mxu0 0
      %298 = vmatpush1.bf16.msra.mxu0 0
      %299 = vmatprep.subr.bf16.mxu0 0
      %300 = vmatpush1.bf16.msra.mxu0 0
      %301 = vmatprep.subr.bf16.mxu0 0
      %302 = vmatpush1.bf16.msra.mxu0 0
      %303 = vmatprep.subr.bf16.mxu0 0
      %304 = vmatpush1.bf16.msra.mxu0 %v277
      %305 = vmatprep.subr.bf16.mxu0 0
      %306 = vmatpush2.bf16.msra.mxu0 0
      %307 = vmatprep.subr.bf16.mxu0 0
      %308 = vmatpush2.bf16.msra.mxu0 0
      %309 = vmatprep.subr.bf16.mxu0 0
      %310 = vmatpush2.bf16.msra.mxu0 0
      %311 = vmatprep.subr.bf16.mxu0 0
      %312 = vmatpush2.bf16.msra.mxu0 0
      %313 = vmatprep.subr.bf16.mxu0 0
      %314 = vmatpush2.bf16.msra.mxu0 0
      %315 = vmatprep.subr.bf16.mxu0 0
      %316 = vmatpush2.bf16.msra.mxu0 0
      %317 = vmatprep.subr.bf16.mxu0 0
      %318 = vmatpush2.bf16.msra.mxu0 0
      %319 = vmatprep.subr.bf16.mxu0 0
      %320 = vmatpush2.bf16.msra.mxu0 0
      %321 = vmatprep.mubr.bf16.mxu0 0
      %322 = vmatmul.mubr.bf16.gmra.mxu0 %v281
      %v323 = vpop.f32.mrf.mxu0
      %v324 = vadd.f32 0.0, %v323
      %v325 = vpop.f32.mrf.mxu0
      %v326 = vpop.f32.mrf.mxu0
      %v327 = vadd.f32 0.0, %v326
      %v328 = vpop.f32.mrf.mxu0
      %329 = vmatprep.mubr.bf16.mxu0 0
      %330 = vmatmul.mubr.bf16.gmra.mxu0 %v284
      %v331 = vpop.f32.mrf.mxu0
      %v332 = vadd.f32 0.0, %v331
      %v333 = vpop.f32.mrf.mxu0
      %v334 = vpop.f32.mrf.mxu0
      %v335 = vadd.f32 0.0, %v334
      %v336 = vpop.f32.mrf.mxu0
      %337 = vmatprep.mubr.bf16.mxu0 0
      %338 = vmatmul.mubr.bf16.gmra.mxu0 %v287
      %v339 = vpop.f32.mrf.mxu0
      %v340 = vadd.f32 0.0, %v339
      %v341 = vpop.f32.mrf.mxu0
      %v342 = vpop.f32.mrf.mxu0
      %v343 = vpop.f32.mrf.mxu0
      %344 = vdwg.mxu0
      %vm345 = vcmask 523264
      %346 = vst.msk [vmem:[#allocation2] sm:$0xff] %vm345, %v324
      %347 = vst.msk [vmem:[#allocation2 + $0x8] sm:$0xff] %vm345, %v327
      %348 = vst.msk [vmem:[#allocation2 + $0x10] sm:$0xff] %vm345, %v332
      %349 = vst.msk [vmem:[#allocation2 + $0x18] sm:$0xff] %vm345, %v335
      %vm350 = vcmask 517120
      %351 = vst.msk [vmem:[#allocation2 + $0x20] sm:$0x3] %vm350, %v340
      %v352 = vld [vmem:[#allocation2] sm:$0xff]
      %v353 = vld [vmem:[#allocation2 + $0x8] sm:$0xff]
      %v354 = vld [vmem:[#allocation2 + $0x10] sm:$0xff]
      %v355 = vld [vmem:[#allocation2 + $0x18] sm:$0xff]
      %v356 = vpack.c.bf16 %v353, %v352
      %v357 = vpack.c.bf16 %v355, %v354
      %v358 = vld [vmem:[%s2] sm:$0xff]
      %v359 = vld [vmem:[%s2 + $0x8] sm:$0xff]
      %v360 = vld [vmem:[%s2 + $0x10] sm:$0xff]
      %v361 = vld [vmem:[%s2 + $0x18] sm:$0xff]
      %v362 = vld [vmem:[%s2 + $0x20] sm:$0xff]
      %v363 = vld [vmem:[%s2 + $0x28] sm:$0xff]
      %v364 = vld [vmem:[%s2 + $0x30] sm:$0xff]
      %v365 = vld [vmem:[%s2 + $0x38] sm:$0xff]
      %v366 = vld [vmem:[#allocation2 + $0x1] sm:$0xff]
      %v367 = vld [vmem:[#allocation2 + $0x9] sm:$0xff]
      %v368 = vld [vmem:[#allocation2 + $0x11] sm:$0xff]
      %v369 = vld [vmem:[#allocation2 + $0x19] sm:$0xff]
      %v370 = vpack.c.bf16 %v367, %v366
      %v371 = vpack.c.bf16 %v369, %v368
      %s372 = scalar_lea.vmem %s2, 64
      %v373 = vld [vmem:[%s372] sm:$0xff]
      %v374 = vld [vmem:[%s372 + $0x8] sm:$0xff]
      %v375 = vld [vmem:[%s372 + $0x10] sm:$0xff]
      %v376 = vld [vmem:[%s372 + $0x18] sm:$0xff]
      %v377 = vld [vmem:[%s372 + $0x20] sm:$0xff]
      %v378 = vld [vmem:[%s372 + $0x28] sm:$0xff]
      %v379 = vld [vmem:[%s372 + $0x30] sm:$0xff]
      %v380 = vld [vmem:[%s372 + $0x38] sm:$0xff]
      %v389 = vunpack.c.l.b16 %v373
      %v390 = vunpack.c.h.b16 %v373
      %v391 = vunpack.c.l.b16 %v374
      %v392 = vunpack.c.h.b16 %v374
      %v393 = vunpack.c.l.b16 %v375
      %v394 = vunpack.c.h.b16 %v375
      %v395 = vunpack.c.l.b16 %v376
      %v396 = vunpack.c.h.b16 %v376
      %v397 = vunpack.c.l.b16 %v377
      %v398 = vunpack.c.h.b16 %v377
      %v399 = vunpack.c.l.b16 %v378
      %v400 = vunpack.c.h.b16 %v378
      %v401 = vunpack.c.l.b16 %v379
      %v402 = vunpack.c.h.b16 %v379
      %v403 = vunpack.c.l.b16 %v380
      %v404 = vunpack.c.h.b16 %v380
      %v405 = vpack.c.b16 %v391, %v389
      %v406 = vpack.c.b16 %v392, %v390
      %v407 = vpack.c.b16 %v395, %v393
      %v408 = vpack.c.b16 %v396, %v394
      %v409 = vpack.c.b16 %v399, %v397
      %v410 = vpack.c.b16 %v400, %v398
      %v411 = vpack.c.b16 %v403, %v401
      %v412 = vpack.c.b16 %v404, %v402
      %v422 = vsel %vm345, %v370, 0
      %v425 = vsel %vm345, %v371, 0
      %427 = vmatprep.subr.bf16.mxu0 0
      %428 = vmatpush1.bf16.msra.mxu0 0
      %429 = vmatprep.subr.bf16.mxu0 0
      %430 = vmatpush1.bf16.msra.mxu0 0
      %431 = vmatprep.subr.bf16.mxu0 0
      %432 = vmatpush1.bf16.msra.mxu0 0
      %433 = vmatprep.subr.bf16.mxu0 0
      %434 = vmatpush1.bf16.msra.mxu0 0
      %435 = vmatprep.subr.bf16.mxu0 %v412
      %436 = vmatpush1.bf16.msra.mxu0 %v411
      %437 = vmatprep.subr.bf16.mxu0 %v410
      %438 = vmatpush1.bf16.msra.mxu0 %v409
      %439 = vmatprep.subr.bf16.mxu0 %v408
      %440 = vmatpush1.bf16.msra.mxu0 %v407
      %441 = vmatprep.subr.bf16.mxu0 %v406
      %442 = vmatpush1.bf16.msra.mxu0 %v405
      %443 = vmatprep.subr.bf16.mxu0 0
      %444 = vmatpush2.bf16.msra.mxu0 0
      %445 = vmatprep.subr.bf16.mxu0 0
      %446 = vmatpush2.bf16.msra.mxu0 0
      %447 = vmatprep.subr.bf16.mxu0 0
      %448 = vmatpush2.bf16.msra.mxu0 0
      %449 = vmatprep.subr.bf16.mxu0 0
      %450 = vmatpush2.bf16.msra.mxu0 0
      %451 = vmatprep.subr.bf16.mxu0 0
      %452 = vmatpush2.bf16.msra.mxu0 0
      %453 = vmatprep.subr.bf16.mxu0 0
      %454 = vmatpush2.bf16.msra.mxu0 0
      %455 = vmatprep.subr.bf16.mxu0 0
      %456 = vmatpush2.bf16.msra.mxu0 0
      %457 = vmatprep.subr.bf16.mxu0 0
      %458 = vmatpush2.bf16.msra.mxu0 0
      %459 = vmatprep.mubr.bf16.mxu0 0
      %460 = vmatmul.mubr.bf16.gmra.mxu0 %v422
      %v461 = vpop.f32.mrf.mxu0
      %v462 = vadd.f32 0.0, %v461
      %v463 = vpop.f32.mrf.mxu0
      %v464 = vadd.f32 0.0, %v463
      %v465 = vpop.f32.mrf.mxu0
      %v466 = vadd.f32 0.0, %v465
      %v467 = vpop.f32.mrf.mxu0
      %v468 = vadd.f32 0.0, %v467
      %469 = vmatprep.mubr.bf16.mxu0 0
      %470 = vmatmul.mubr.bf16.gmra.mxu0 %v425
      %v471 = vpop.f32.mrf.mxu0
      %v472 = vadd.f32 0.0, %v471
      %v473 = vpop.f32.mrf.mxu0
      %v474 = vadd.f32 0.0, %v473
      %v475 = vpop.f32.mrf.mxu0
      %v476 = vadd.f32 0.0, %v475
      %v477 = vpop.f32.mrf.mxu0
      %v478 = vadd.f32 0.0, %v477
      %479 = vdwg.mxu0
      %v488 = vunpack.c.l.b16 %v358
      %v489 = vunpack.c.h.b16 %v358
      %v490 = vunpack.c.l.b16 %v359
      %v491 = vunpack.c.h.b16 %v359
      %v492 = vunpack.c.l.b16 %v360
      %v493 = vunpack.c.h.b16 %v360
      %v494 = vunpack.c.l.b16 %v361
      %v495 = vunpack.c.h.b16 %v361
      %v496 = vunpack.c.l.b16 %v362
      %v497 = vunpack.c.h.b16 %v362
      %v498 = vunpack.c.l.b16 %v363
      %v499 = vunpack.c.h.b16 %v363
      %v500 = vunpack.c.l.b16 %v364
      %v501 = vunpack.c.h.b16 %v364
      %v502 = vunpack.c.l.b16 %v365
      %v503 = vunpack.c.h.b16 %v365
      %v504 = vpack.c.b16 %v490, %v488
      %v505 = vpack.c.b16 %v491, %v489
      %v506 = vpack.c.b16 %v494, %v492
      %v507 = vpack.c.b16 %v495, %v493
      %v508 = vpack.c.b16 %v498, %v496
      %v509 = vpack.c.b16 %v499, %v497
      %v510 = vpack.c.b16 %v502, %v500
      %v511 = vpack.c.b16 %v503, %v501
      %v521 = vsel %vm345, %v356, 0
      %v524 = vsel %vm345, %v357, 0
      %526 = vmatprep.subr.bf16.mxu0 0
      %527 = vmatpush1.bf16.msra.mxu0 0
      %528 = vmatprep.subr.bf16.mxu0 0
      %529 = vmatpush1.bf16.msra.mxu0 0
      %530 = vmatprep.subr.bf16.mxu0 0
      %531 = vmatpush1.bf16.msra.mxu0 0
      %532 = vmatprep.subr.bf16.mxu0 0
      %533 = vmatpush1.bf16.msra.mxu0 0
      %534 = vmatprep.subr.bf16.mxu0 %v511
      %535 = vmatpush1.bf16.msra.mxu0 %v510
      %536 = vmatprep.subr.bf16.mxu0 %v509
      %537 = vmatpush1.bf16.msra.mxu0 %v508
      %538 = vmatprep.subr.bf16.mxu0 %v507
      %539 = vmatpush1.bf16.msra.mxu0 %v506
      %540 = vmatprep.subr.bf16.mxu0 %v505
      %541 = vmatpush1.bf16.msra.mxu0 %v504
      %542 = vmatprep.subr.bf16.mxu0 0
      %543 = vmatpush2.bf16.msra.mxu0 0
      %544 = vmatprep.subr.bf16.mxu0 0
      %545 = vmatpush2.bf16.msra.mxu0 0
      %546 = vmatprep.subr.bf16.mxu0 0
      %547 = vmatpush2.bf16.msra.mxu0 0
      %548 = vmatprep.subr.bf16.mxu0 0
      %549 = vmatpush2.bf16.msra.mxu0 0
      %550 = vmatprep.subr.bf16.mxu0 0
      %551 = vmatpush2.bf16.msra.mxu0 0
      %552 = vmatprep.subr.bf16.mxu0 0
      %553 = vmatpush2.bf16.msra.mxu0 0
      %554 = vmatprep.subr.bf16.mxu0 0
      %555 = vmatpush2.bf16.msra.mxu0 0
      %556 = vmatprep.subr.bf16.mxu0 0
      %557 = vmatpush2.bf16.msra.mxu0 0
      %558 = vmatprep.mubr.bf16.mxu0 0
      %559 = vmatmul.mubr.bf16.gmra.mxu0 %v521
      %v560 = vpop.f32.mrf.mxu0
      %v561 = vadd.f32 %v462, %v560
      %v562 = vpop.f32.mrf.mxu0
      %v563 = vadd.f32 %v464, %v562
      %v564 = vpop.f32.mrf.mxu0
      %v565 = vadd.f32 %v466, %v564
      %v566 = vpop.f32.mrf.mxu0
      %v567 = vadd.f32 %v468, %v566
      %568 = vmatprep.mubr.bf16.mxu0 0
      %569 = vmatmul.mubr.bf16.gmra.mxu0 %v524
      %v570 = vpop.f32.mrf.mxu0
      %v571 = vadd.f32 %v472, %v570
      %v572 = vpop.f32.mrf.mxu0
      %v573 = vadd.f32 %v474, %v572
      %v574 = vpop.f32.mrf.mxu0
      %v575 = vadd.f32 %v476, %v574
      %v576 = vpop.f32.mrf.mxu0
      %v577 = vadd.f32 %v478, %v576
      %578 = vdwg.mxu0
      %v579 = vld [vmem:[#allocation2 + $0x2] sm:$0xff]
      %v580 = vld [vmem:[#allocation2 + $0xa] sm:$0xff]
      %v581 = vld [vmem:[#allocation2 + $0x12] sm:$0xff]
      %v582 = vld [vmem:[#allocation2 + $0x1a] sm:$0xff]
      %v583 = vpack.c.bf16 %v580, %v579
      %v584 = vpack.c.bf16 %v582, %v581
      %s585 = scalar_lea.vmem %s2, 128
      %v586 = vld [vmem:[%s585] sm:$0xff]
      %v587 = vld [vmem:[%s585 + $0x8] sm:$0xff]
      %v588 = vld [vmem:[%s585 + $0x10] sm:$0xff]
      %v589 = vld [vmem:[%s585 + $0x18] sm:$0xff]
      %v590 = vld [vmem:[%s585 + $0x20] sm:$0xff]
      %v591 = vld [vmem:[%s585 + $0x28] sm:$0xff]
      %v592 = vld [vmem:[%s585 + $0x30] sm:$0xff]
      %v593 = vld [vmem:[%s585 + $0x38] sm:$0xff]
      %v602 = vunpack.c.l.b16 %v586
      %v603 = vunpack.c.h.b16 %v586
      %v604 = vunpack.c.l.b16 %v587
      %v605 = vunpack.c.h.b16 %v587
      %v606 = vunpack.c.l.b16 %v588
      %v607 = vunpack.c.h.b16 %v588
      %v608 = vunpack.c.l.b16 %v589
      %v609 = vunpack.c.h.b16 %v589
      %v610 = vunpack.c.l.b16 %v590
      %v611 = vunpack.c.h.b16 %v590
      %v612 = vunpack.c.l.b16 %v591
      %v613 = vunpack.c.h.b16 %v591
      %v614 = vunpack.c.l.b16 %v592
      %v615 = vunpack.c.h.b16 %v592
      %v616 = vunpack.c.l.b16 %v593
      %v617 = vunpack.c.h.b16 %v593
      %v618 = vpack.c.b16 %v604, %v602
      %v619 = vpack.c.b16 %v605, %v603
      %v620 = vpack.c.b16 %v608, %v606
      %v621 = vpack.c.b16 %v609, %v607
      %v622 = vpack.c.b16 %v612, %v610
      %v623 = vpack.c.b16 %v613, %v611
      %v624 = vpack.c.b16 %v616, %v614
      %v625 = vpack.c.b16 %v617, %v615
      %v635 = vsel %vm345, %v583, 0
      %v638 = vsel %vm345, %v584, 0
      %640 = vmatprep.subr.bf16.mxu0 0
      %641 = vmatpush1.bf16.msra.mxu0 0
      %642 = vmatprep.subr.bf16.mxu0 0
      %643 = vmatpush1.bf16.msra.mxu0 0
      %644 = vmatprep.subr.bf16.mxu0 0
      %645 = vmatpush1.bf16.msra.mxu0 0
      %646 = vmatprep.subr.bf16.mxu0 0
      %647 = vmatpush1.bf16.msra.mxu0 0
      %648 = vmatprep.subr.bf16.mxu0 %v625
      %649 = vmatpush1.bf16.msra.mxu0 %v624
      %650 = vmatprep.subr.bf16.mxu0 %v623
      %651 = vmatpush1.bf16.msra.mxu0 %v622
      %652 = vmatprep.subr.bf16.mxu0 %v621
      %653 = vmatpush1.bf16.msra.mxu0 %v620
      %654 = vmatprep.subr.bf16.mxu0 %v619
      %655 = vmatpush1.bf16.msra.mxu0 %v618
      %656 = vmatprep.subr.bf16.mxu0 0
      %657 = vmatpush2.bf16.msra.mxu0 0
      %658 = vmatprep.subr.bf16.mxu0 0
      %659 = vmatpush2.bf16.msra.mxu0 0
      %660 = vmatprep.subr.bf16.mxu0 0
      %661 = vmatpush2.bf16.msra.mxu0 0
      %662 = vmatprep.subr.bf16.mxu0 0
      %663 = vmatpush2.bf16.msra.mxu0 0
      %664 = vmatprep.subr.bf16.mxu0 0
      %665 = vmatpush2.bf16.msra.mxu0 0
      %666 = vmatprep.subr.bf16.mxu0 0
      %667 = vmatpush2.bf16.msra.mxu0 0
      %668 = vmatprep.subr.bf16.mxu0 0
      %669 = vmatpush2.bf16.msra.mxu0 0
      %670 = vmatprep.subr.bf16.mxu0 0
      %671 = vmatpush2.bf16.msra.mxu0 0
      %672 = vmatprep.mubr.bf16.mxu0 0
      %673 = vmatmul.mubr.bf16.gmra.mxu0 %v635
      %v674 = vpop.f32.mrf.mxu0
      %v675 = vadd.f32 0.0, %v674
      %v676 = vpop.f32.mrf.mxu0
      %v677 = vadd.f32 0.0, %v676
      %v678 = vpop.f32.mrf.mxu0
      %v679 = vadd.f32 0.0, %v678
      %v680 = vpop.f32.mrf.mxu0
      %v681 = vadd.f32 0.0, %v680
      %682 = vmatprep.mubr.bf16.mxu0 0
      %683 = vmatmul.mubr.bf16.gmra.mxu0 %v638
      %v684 = vpop.f32.mrf.mxu0
      %v685 = vadd.f32 0.0, %v684
      %v686 = vpop.f32.mrf.mxu0
      %v687 = vadd.f32 0.0, %v686
      %v688 = vpop.f32.mrf.mxu0
      %v689 = vadd.f32 0.0, %v688
      %v690 = vpop.f32.mrf.mxu0
      %v691 = vadd.f32 0.0, %v690
      %692 = vdwg.mxu0
      %v693 = vadd.f32 %v561, %v675
      %v694 = vadd.f32 %v563, %v677
      %v695 = vadd.f32 %v565, %v679
      %v696 = vadd.f32 %v567, %v681
      %v697 = vadd.f32 %v571, %v685
      %v698 = vadd.f32 %v573, %v687
      %v699 = vadd.f32 %v575, %v689
      %v700 = vadd.f32 %v577, %v691
      %v701 = vld [vmem:[%s3] sm:$0x3]
      %v703 = vlaneseq
      %v704 = vshrl.u32 %v703, 7
      %v705 = vsub.s32 0, %v704
      %v706 = vrot.slane %v701, %v705
      %v707 = vlaneseq
      %v708 = vshrl.u32 %v707, 7
      %v709 = vsub.s32 1, %v708
      %v710 = vrot.slane %v701, %v709
      %v713 = vadd.f32 %v693, %v706
      %v714 = vadd.f32 %v694, %v710
      %v715 = vadd.f32 %v695, %v706
      %v716 = vadd.f32 %v696, %v710
      %v717 = vadd.f32 %v697, %v706
      %v718 = vadd.f32 %v698, %v710
      %v719 = vadd.f32 %v699, %v706
      %v720 = vadd.f32 %v700, %v710
      %vm721 = vcmp.gt.f32.partialorder %v713, 0.0
      %vm722 = vcmp.gt.f32.partialorder %v714, 0.0
      %vm723 = vcmp.gt.f32.partialorder %v715, 0.0
      %vm724 = vcmp.gt.f32.partialorder %v716, 0.0
      %vm725 = vcmp.gt.f32.partialorder %v717, 0.0
      %vm726 = vcmp.gt.f32.partialorder %v718, 0.0
      %vm727 = vcmp.gt.f32.partialorder %v719, 0.0
      %vm728 = vcmp.gt.f32.partialorder %v720, 0.0
      %v729 = vmul.f32 %v713, 0.2
      %v730 = vmul.f32 %v714, 0.2
      %v731 = vmul.f32 %v715, 0.2
      %v732 = vmul.f32 %v716, 0.2
      %v733 = vmul.f32 %v717, 0.2
      %v734 = vmul.f32 %v718, 0.2
      %v735 = vmul.f32 %v719, 0.2
      %v736 = vmul.f32 %v720, 0.2
      %v737 = vsel %vm721, %v713, %v729
      %v738 = vsel %vm722, %v714, %v730
      %v739 = vsel %vm723, %v715, %v731
      %v740 = vsel %vm724, %v716, %v732
      %v741 = vsel %vm725, %v717, %v733
      %v742 = vsel %vm726, %v718, %v734
      %v743 = vsel %vm727, %v719, %v735
      %v744 = vsel %vm728, %v720, %v736
      %v745 = vlaneseq
      %vm746 = vcmp.ge.s32.totalorder %v745, 0
      %vm747 = vcmp.lt.s32.totalorder %v745, 256
      %vm748 = vmand %vm746, %vm747
      %749 = vst.msk [vmem:[#allocation3] ss:$8 sm:$0x3] %vm748, 0.0
      %750 = vst.msk [vmem:[#allocation3] ss:$8 sm:$0x0] %vm748, 0.0
      %s751 = scalar_lea.vmem [#allocation3], 65
      %752 = vst.msk [vmem:[%s751] ss:$8 sm:$0x3] %vm748, 0.0
      %753 = vst.msk [vmem:[%s751] ss:$8 sm:$0x0] %vm748, 0.0
      %vm762 = vcmask 1040384
      %v763 = vrot.slane %v737, 7
      %v764 = vrot.slane %v738, 7
      %v765 = vrot.slane %v739, 7
      %v766 = vsel %vm762, %v763, %v765
      %v767 = vrot.slane %v740, 7
      %v768 = vsel %vm762, %v764, %v767
      %v769 = vrot.slane %v741, 7
      %v770 = vsel %vm762, %v765, %v769
      %v771 = vrot.slane %v742, 7
      %v772 = vsel %vm762, %v767, %v771
      %v773 = vrot.slane %v743, 7
      %v774 = vsel %vm762, %v769, %v773
      %v775 = vrot.slane %v744, 7
      %v776 = vsel %vm762, %v771, %v775
      %787 = vst [vmem:[#allocation3] sm:$0xfe] %v763
      %788 = vst [vmem:[#allocation3 + $0x8] sm:$0xfe] %v764
      %789 = vst [vmem:[#allocation3 + $0x10] sm:$0xff] %v766
      %790 = vst [vmem:[#allocation3 + $0x18] sm:$0xff] %v768
      %791 = vst [vmem:[#allocation3 + $0x20] sm:$0xff] %v770
      %792 = vst [vmem:[#allocation3 + $0x28] sm:$0xff] %v772
      %793 = vst [vmem:[#allocation3 + $0x30] sm:$0xff] %v774
      %794 = vst [vmem:[#allocation3 + $0x38] sm:$0xff] %v776
      %795 = vst [vmem:[#allocation3 + $0x40] sm:$0x1] %v773
      %796 = vst [vmem:[#allocation3 + $0x48] sm:$0x1] %v775
      %v797 = vld [vmem:[#allocation3] sm:$0xff]
      %v798 = vld [vmem:[#allocation3 + $0x8] sm:$0xff]
      %v799 = vld [vmem:[#allocation3 + $0x10] sm:$0xff]
      %v800 = vld [vmem:[#allocation3 + $0x18] sm:$0xff]
      %v801 = vld [vmem:[#allocation3 + $0x20] sm:$0xff]
      %v802 = vld [vmem:[#allocation3 + $0x28] sm:$0xff]
      %v803 = vld [vmem:[#allocation3 + $0x30] sm:$0xff]
      %v804 = vld [vmem:[#allocation3 + $0x38] sm:$0xff]
      %v805 = vpack.c.bf16 %v799, %v797
      %v806 = vpack.c.bf16 %v800, %v798
      %v807 = vpack.c.bf16 %v803, %v801
      %v808 = vpack.c.bf16 %v804, %v802
      %v809 = vld [vmem:[%s4] sm:$0xff]
      %v810 = vld [vmem:[%s4 + $0x8] sm:$0xff]
      %v811 = vld [vmem:[%s4 + $0x10] sm:$0xff]
      %v812 = vld [vmem:[%s4 + $0x18] sm:$0xff]
      %v813 = vld [vmem:[%s4 + $0x20] sm:$0xff]
      %v814 = vld [vmem:[%s4 + $0x28] sm:$0xff]
      %v815 = vld [vmem:[%s4 + $0x30] sm:$0xff]
      %v816 = vld [vmem:[%s4 + $0x38] sm:$0xff]
      %v817 = vld [vmem:[%s4 + $0x40] sm:$0xff]
      %v818 = vld [vmem:[%s4 + $0x48] sm:$0xff]
      %v819 = vld [vmem:[%s4 + $0x50] sm:$0xff]
      %v820 = vld [vmem:[%s4 + $0x58] sm:$0xff]
      %v821 = vld [vmem:[%s4 + $0x60] sm:$0xff]
      %v822 = vld [vmem:[%s4 + $0x68] sm:$0xff]
      %v823 = vld [vmem:[%s4 + $0x70] sm:$0xff]
      %v824 = vld [vmem:[%s4 + $0x78] sm:$0xff]
      %v825 = vld [vmem:[%s4 + $0x80] sm:$0xff]
      %v826 = vld [vmem:[%s4 + $0x88] sm:$0xff]
      %v827 = vld [vmem:[%s4 + $0x90] sm:$0xff]
      %v828 = vld [vmem:[%s4 + $0x98] sm:$0xff]
      %v829 = vld [vmem:[%s4 + $0xa0] sm:$0xff]
      %v830 = vld [vmem:[%s4 + $0xa8] sm:$0xff]
      %v831 = vld [vmem:[%s4 + $0xb0] sm:$0xff]
      %v832 = vld [vmem:[%s4 + $0xb8] sm:$0xff]
      %v833 = vld [vmem:[%s4 + $0xc0] sm:$0xff]
      %v834 = vld [vmem:[%s4 + $0xc8] sm:$0xff]
      %v835 = vld [vmem:[%s4 + $0xd0] sm:$0xff]
      %v836 = vld [vmem:[%s4 + $0xd8] sm:$0xff]
      %v837 = vld [vmem:[%s4 + $0xe0] sm:$0xff]
      %v838 = vld [vmem:[%s4 + $0xe8] sm:$0xff]
      %v839 = vld [vmem:[%s4 + $0xf0] sm:$0xff]
      %v840 = vld [vmem:[%s4 + $0xf8] sm:$0xff]
      %v841 = vld [vmem:[#allocation3] sm:$0xfe]
      %v842 = vld [vmem:[#allocation3 + $0x8] sm:$0xfe]
      %v843 = vld [vmem:[#allocation3 + $0x40] sm:$0x1]
      %v844 = vld [vmem:[#allocation3 + $0x48] sm:$0x1]
      %v845 = vpack.c.bf16 %v799, %v841
      %v846 = vpack.c.bf16 %v800, %v842
      %v847 = vpack.c.bf16 %v843, %v843
      %v848 = vpack.c.bf16 %v844, %v844
      %s849 = scalar_lea.vmem %s4, 256
      %v850 = vld [vmem:[%s849] sm:$0xff]
      %v851 = vld [vmem:[%s849 + $0x8] sm:$0xff]
      %v852 = vld [vmem:[%s849 + $0x10] sm:$0xff]
      %v853 = vld [vmem:[%s849 + $0x18] sm:$0xff]
      %v854 = vld [vmem:[%s849 + $0x20] sm:$0xff]
      %v855 = vld [vmem:[%s849 + $0x28] sm:$0xff]
      %v856 = vld [vmem:[%s849 + $0x30] sm:$0xff]
      %v857 = vld [vmem:[%s849 + $0x38] sm:$0xff]
      %v858 = vld [vmem:[%s849 + $0x40] sm:$0xff]
      %v859 = vld [vmem:[%s849 + $0x48] sm:$0xff]
      %v860 = vld [vmem:[%s849 + $0x50] sm:$0xff]
      %v861 = vld [vmem:[%s849 + $0x58] sm:$0xff]
      %v862 = vld [vmem:[%s849 + $0x60] sm:$0xff]
      %v863 = vld [vmem:[%s849 + $0x68] sm:$0xff]
      %v864 = vld [vmem:[%s849 + $0x70] sm:$0xff]
      %v865 = vld [vmem:[%s849 + $0x78] sm:$0xff]
      %v866 = vld [vmem:[%s849 + $0x80] sm:$0xff]
      %v867 = vld [vmem:[%s849 + $0x88] sm:$0xff]
      %v868 = vld [vmem:[%s849 + $0x90] sm:$0xff]
      %v869 = vld [vmem:[%s849 + $0x98] sm:$0xff]
      %v870 = vld [vmem:[%s849 + $0xa0] sm:$0xff]
      %v871 = vld [vmem:[%s849 + $0xa8] sm:$0xff]
      %v872 = vld [vmem:[%s849 + $0xb0] sm:$0xff]
      %v873 = vld [vmem:[%s849 + $0xb8] sm:$0xff]
      %v874 = vld [vmem:[%s849 + $0xc0] sm:$0xff]
      %v875 = vld [vmem:[%s849 + $0xc8] sm:$0xff]
      %v876 = vld [vmem:[%s849 + $0xd0] sm:$0xff]
      %v877 = vld [vmem:[%s849 + $0xd8] sm:$0xff]
      %v878 = vld [vmem:[%s849 + $0xe0] sm:$0xff]
      %v879 = vld [vmem:[%s849 + $0xe8] sm:$0xff]
      %v880 = vld [vmem:[%s849 + $0xf0] sm:$0xff]
      %v881 = vld [vmem:[%s849 + $0xf8] sm:$0xff]
      %vm882 = vsmask.f32 7424
      %v884 = vshrl.u32 %v845, 16
      %v886 = vshll.u32 %v845, 16
      %v888 = vrot.slane %v886, 1
      %v889 = vor.u32 %v884, %v888
      %v891 = vshll.u32 %v807, 16
      %v893 = vrot.slane %v891, 1
      %v894 = vsel %vm882, %v889, %v893
      %v896 = vshrl.u32 %v846, 16
      %v898 = vshll.u32 %v846, 16
      %v900 = vrot.slane %v898, 1
      %v901 = vor.u32 %v896, %v900
      %v903 = vshll.u32 %v808, 16
      %v905 = vrot.slane %v903, 1
      %v906 = vsel %vm882, %v901, %v905
      %v907 = vshrl.u32 %v807, 16
      %v909 = vor.u32 %v907, %v893
      %v911 = vshll.u32 %v847, 16
      %v913 = vrot.slane %v911, 1
      %v914 = vsel %vm882, %v909, %v913
      %v915 = vshrl.u32 %v808, 16
      %v917 = vor.u32 %v915, %v905
      %v919 = vshll.u32 %v848, 16
      %v921 = vrot.slane %v919, 1
      %v922 = vsel %vm882, %v917, %v921
      %v959 = vunpack.c.l.b16 %v850
      %v960 = vunpack.c.h.b16 %v850
      %v961 = vunpack.c.l.b16 %v851
      %v962 = vunpack.c.h.b16 %v851
      %v963 = vunpack.c.l.b16 %v852
      %v964 = vunpack.c.h.b16 %v852
      %v965 = vunpack.c.l.b16 %v853
      %v966 = vunpack.c.h.b16 %v853
      %v967 = vunpack.c.l.b16 %v854
      %v968 = vunpack.c.h.b16 %v854
      %v969 = vunpack.c.l.b16 %v855
      %v970 = vunpack.c.h.b16 %v855
      %v971 = vunpack.c.l.b16 %v856
      %v972 = vunpack.c.h.b16 %v856
      %v973 = vunpack.c.l.b16 %v857
      %v974 = vunpack.c.h.b16 %v857
      %v975 = vunpack.c.l.b16 %v858
      %v976 = vunpack.c.h.b16 %v858
      %v977 = vunpack.c.l.b16 %v859
      %v978 = vunpack.c.h.b16 %v859
      %v979 = vunpack.c.l.b16 %v860
      %v980 = vunpack.c.h.b16 %v860
      %v981 = vunpack.c.l.b16 %v861
      %v982 = vunpack.c.h.b16 %v861
      %v983 = vunpack.c.l.b16 %v862
      %v984 = vunpack.c.h.b16 %v862
      %v985 = vunpack.c.l.b16 %v863
      %v986 = vunpack.c.h.b16 %v863
      %v987 = vunpack.c.l.b16 %v864
      %v988 = vunpack.c.h.b16 %v864
      %v989 = vunpack.c.l.b16 %v865
      %v990 = vunpack.c.h.b16 %v865
      %v991 = vunpack.c.l.b16 %v866
      %v992 = vunpack.c.h.b16 %v866
      %v993 = vunpack.c.l.b16 %v867
      %v994 = vunpack.c.h.b16 %v867
      %v995 = vunpack.c.l.b16 %v868
      %v996 = vunpack.c.h.b16 %v868
      %v997 = vunpack.c.l.b16 %v869
      %v998 = vunpack.c.h.b16 %v869
      %v999 = vunpack.c.l.b16 %v870
      %v1000 = vunpack.c.h.b16 %v870
      %v1001 = vunpack.c.l.b16 %v871
      %v1002 = vunpack.c.h.b16 %v871
      %v1003 = vunpack.c.l.b16 %v872
      %v1004 = vunpack.c.h.b16 %v872
      %v1005 = vunpack.c.l.b16 %v873
      %v1006 = vunpack.c.h.b16 %v873
      %v1007 = vunpack.c.l.b16 %v874
      %v1008 = vunpack.c.h.b16 %v874
      %v1009 = vunpack.c.l.b16 %v875
      %v1010 = vunpack.c.h.b16 %v875
      %v1011 = vunpack.c.l.b16 %v876
      %v1012 = vunpack.c.h.b16 %v876
      %v1013 = vunpack.c.l.b16 %v877
      %v1014 = vunpack.c.h.b16 %v877
      %v1015 = vunpack.c.l.b16 %v878
      %v1016 = vunpack.c.h.b16 %v878
      %v1017 = vunpack.c.l.b16 %v879
      %v1018 = vunpack.c.h.b16 %v879
      %v1019 = vunpack.c.l.b16 %v880
      %v1020 = vunpack.c.h.b16 %v880
      %v1021 = vunpack.c.l.b16 %v881
      %v1022 = vunpack.c.h.b16 %v881
      %v1023 = vpack.c.b16 %v961, %v959
      %v1024 = vpack.c.b16 %v962, %v960
      %v1025 = vpack.c.b16 %v965, %v963
      %v1026 = vpack.c.b16 %v966, %v964
      %v1027 = vpack.c.b16 %v969, %v967
      %v1028 = vpack.c.b16 %v970, %v968
      %v1029 = vpack.c.b16 %v973, %v971
      %v1030 = vpack.c.b16 %v974, %v972
      %v1031 = vpack.c.b16 %v977, %v975
      %v1032 = vpack.c.b16 %v978, %v976
      %v1033 = vpack.c.b16 %v981, %v979
      %v1034 = vpack.c.b16 %v982, %v980
      %v1035 = vpack.c.b16 %v985, %v983
      %v1036 = vpack.c.b16 %v986, %v984
      %v1037 = vpack.c.b16 %v989, %v987
      %v1038 = vpack.c.b16 %v990, %v988
      %v1039 = vpack.c.b16 %v993, %v991
      %v1040 = vpack.c.b16 %v994, %v992
      %v1041 = vpack.c.b16 %v997, %v995
      %v1042 = vpack.c.b16 %v998, %v996
      %v1043 = vpack.c.b16 %v1001, %v999
      %v1044 = vpack.c.b16 %v1002, %v1000
      %v1045 = vpack.c.b16 %v1005, %v1003
      %v1046 = vpack.c.b16 %v1006, %v1004
      %v1047 = vpack.c.b16 %v1009, %v1007
      %v1048 = vpack.c.b16 %v1010, %v1008
      %v1049 = vpack.c.b16 %v1013, %v1011
      %v1050 = vpack.c.b16 %v1014, %v1012
      %v1051 = vpack.c.b16 %v1017, %v1015
      %v1052 = vpack.c.b16 %v1018, %v1016
      %v1053 = vpack.c.b16 %v1021, %v1019
      %v1054 = vpack.c.b16 %v1022, %v1020
      %1087 = vmatprep.subr.bf16.mxu0 %v1038
      %1088 = vmatpush1.bf16.msra.mxu0 %v1037
      %1089 = vmatprep.subr.bf16.mxu0 %v1036
      %1090 = vmatpush1.bf16.msra.mxu0 %v1035
      %1091 = vmatprep.subr.bf16.mxu0 %v1034
      %1092 = vmatpush1.bf16.msra.mxu0 %v1033
      %1093 = vmatprep.subr.bf16.mxu0 %v1032
      %1094 = vmatpush1.bf16.msra.mxu0 %v1031
      %1095 = vmatprep.subr.bf16.mxu0 %v1030
      %1096 = vmatpush1.bf16.msra.mxu0 %v1029
      %1097 = vmatprep.subr.bf16.mxu0 %v1028
      %1098 = vmatpush1.bf16.msra.mxu0 %v1027
      %1099 = vmatprep.subr.bf16.mxu0 %v1026
      %1100 = vmatpush1.bf16.msra.mxu0 %v1025
      %1101 = vmatprep.subr.bf16.mxu0 %v1024
      %1102 = vmatpush1.bf16.msra.mxu0 %v1023
      %1103 = vmatprep.subr.bf16.mxu0 %v1054
      %1104 = vmatpush2.bf16.msra.mxu0 %v1053
      %1105 = vmatprep.subr.bf16.mxu0 %v1052
      %1106 = vmatpush2.bf16.msra.mxu0 %v1051
      %1107 = vmatprep.subr.bf16.mxu0 %v1050
      %1108 = vmatpush2.bf16.msra.mxu0 %v1049
      %1109 = vmatprep.subr.bf16.mxu0 %v1048
      %1110 = vmatpush2.bf16.msra.mxu0 %v1047
      %1111 = vmatprep.subr.bf16.mxu0 %v1046
      %1112 = vmatpush2.bf16.msra.mxu0 %v1045
      %1113 = vmatprep.subr.bf16.mxu0 %v1044
      %1114 = vmatpush2.bf16.msra.mxu0 %v1043
      %1115 = vmatprep.subr.bf16.mxu0 %v1042
      %1116 = vmatpush2.bf16.msra.mxu0 %v1041
      %1117 = vmatprep.subr.bf16.mxu0 %v1040
      %1118 = vmatpush2.bf16.msra.mxu0 %v1039
      %1119 = vmatprep.mubr.bf16.mxu0 %v906
      %1120 = vmatmul.mubr.bf16.gmra.mxu0 %v894
      %v1121 = vpop.f32.mrf.mxu0
      %v1122 = vadd.f32 0.0, %v1121
      %v1123 = vpop.f32.mrf.mxu0
      %v1124 = vadd.f32 0.0, %v1123
      %v1125 = vpop.f32.mrf.mxu0
      %v1126 = vadd.f32 0.0, %v1125
      %v1127 = vpop.f32.mrf.mxu0
      %v1128 = vadd.f32 0.0, %v1127
      %1129 = vmatprep.mubr.bf16.mxu0 %v922
      %1130 = vmatmul.mubr.bf16.gmra.mxu0 %v914
      %v1131 = vpop.f32.mrf.mxu0
      %v1132 = vadd.f32 0.0, %v1131
      %v1133 = vpop.f32.mrf.mxu0
      %v1134 = vadd.f32 0.0, %v1133
      %v1135 = vpop.f32.mrf.mxu0
      %v1136 = vadd.f32 0.0, %v1135
      %v1137 = vpop.f32.mrf.mxu0
      %v1138 = vadd.f32 0.0, %v1137
      %1139 = vdwg.mxu0
      %v1172 = vunpack.c.l.b16 %v809
      %v1173 = vunpack.c.h.b16 %v809
      %v1174 = vunpack.c.l.b16 %v810
      %v1175 = vunpack.c.h.b16 %v810
      %v1176 = vunpack.c.l.b16 %v811
      %v1177 = vunpack.c.h.b16 %v811
      %v1178 = vunpack.c.l.b16 %v812
      %v1179 = vunpack.c.h.b16 %v812
      %v1180 = vunpack.c.l.b16 %v813
      %v1181 = vunpack.c.h.b16 %v813
      %v1182 = vunpack.c.l.b16 %v814
      %v1183 = vunpack.c.h.b16 %v814
      %v1184 = vunpack.c.l.b16 %v815
      %v1185 = vunpack.c.h.b16 %v815
      %v1186 = vunpack.c.l.b16 %v816
      %v1187 = vunpack.c.h.b16 %v816
      %v1188 = vunpack.c.l.b16 %v817
      %v1189 = vunpack.c.h.b16 %v817
      %v1190 = vunpack.c.l.b16 %v818
      %v1191 = vunpack.c.h.b16 %v818
      %v1192 = vunpack.c.l.b16 %v819
      %v1193 = vunpack.c.h.b16 %v819
      %v1194 = vunpack.c.l.b16 %v820
      %v1195 = vunpack.c.h.b16 %v820
      %v1196 = vunpack.c.l.b16 %v821
      %v1197 = vunpack.c.h.b16 %v821
      %v1198 = vunpack.c.l.b16 %v822
      %v1199 = vunpack.c.h.b16 %v822
      %v1200 = vunpack.c.l.b16 %v823
      %v1201 = vunpack.c.h.b16 %v823
      %v1202 = vunpack.c.l.b16 %v824
      %v1203 = vunpack.c.h.b16 %v824
      %v1204 = vunpack.c.l.b16 %v825
      %v1205 = vunpack.c.h.b16 %v825
      %v1206 = vunpack.c.l.b16 %v826
      %v1207 = vunpack.c.h.b16 %v826
      %v1208 = vunpack.c.l.b16 %v827
      %v1209 = vunpack.c.h.b16 %v827
      %v1210 = vunpack.c.l.b16 %v828
      %v1211 = vunpack.c.h.b16 %v828
      %v1212 = vunpack.c.l.b16 %v829
      %v1213 = vunpack.c.h.b16 %v829
      %v1214 = vunpack.c.l.b16 %v830
      %v1215 = vunpack.c.h.b16 %v830
      %v1216 = vunpack.c.l.b16 %v831
      %v1217 = vunpack.c.h.b16 %v831
      %v1218 = vunpack.c.l.b16 %v832
      %v1219 = vunpack.c.h.b16 %v832
      %v1220 = vunpack.c.l.b16 %v833
      %v1221 = vunpack.c.h.b16 %v833
      %v1222 = vunpack.c.l.b16 %v834
      %v1223 = vunpack.c.h.b16 %v834
      %v1224 = vunpack.c.l.b16 %v835
      %v1225 = vunpack.c.h.b16 %v835
      %v1226 = vunpack.c.l.b16 %v836
      %v1227 = vunpack.c.h.b16 %v836
      %v1228 = vunpack.c.l.b16 %v837
      %v1229 = vunpack.c.h.b16 %v837
      %v1230 = vunpack.c.l.b16 %v838
      %v1231 = vunpack.c.h.b16 %v838
      %v1232 = vunpack.c.l.b16 %v839
      %v1233 = vunpack.c.h.b16 %v839
      %v1234 = vunpack.c.l.b16 %v840
      %v1235 = vunpack.c.h.b16 %v840
      %v1236 = vpack.c.b16 %v1174, %v1172
      %v1237 = vpack.c.b16 %v1175, %v1173
      %v1238 = vpack.c.b16 %v1178, %v1176
      %v1239 = vpack.c.b16 %v1179, %v1177
      %v1240 = vpack.c.b16 %v1182, %v1180
      %v1241 = vpack.c.b16 %v1183, %v1181
      %v1242 = vpack.c.b16 %v1186, %v1184
      %v1243 = vpack.c.b16 %v1187, %v1185
      %v1244 = vpack.c.b16 %v1190, %v1188
      %v1245 = vpack.c.b16 %v1191, %v1189
      %v1246 = vpack.c.b16 %v1194, %v1192
      %v1247 = vpack.c.b16 %v1195, %v1193
      %v1248 = vpack.c.b16 %v1198, %v1196
      %v1249 = vpack.c.b16 %v1199, %v1197
      %v1250 = vpack.c.b16 %v1202, %v1200
      %v1251 = vpack.c.b16 %v1203, %v1201
      %v1252 = vpack.c.b16 %v1206, %v1204
      %v1253 = vpack.c.b16 %v1207, %v1205
      %v1254 = vpack.c.b16 %v1210, %v1208
      %v1255 = vpack.c.b16 %v1211, %v1209
      %v1256 = vpack.c.b16 %v1214, %v1212
      %v1257 = vpack.c.b16 %v1215, %v1213
      %v1258 = vpack.c.b16 %v1218, %v1216
      %v1259 = vpack.c.b16 %v1219, %v1217
      %v1260 = vpack.c.b16 %v1222, %v1220
      %v1261 = vpack.c.b16 %v1223, %v1221
      %v1262 = vpack.c.b16 %v1226, %v1224
      %v1263 = vpack.c.b16 %v1227, %v1225
      %v1264 = vpack.c.b16 %v1230, %v1228
      %v1265 = vpack.c.b16 %v1231, %v1229
      %v1266 = vpack.c.b16 %v1234, %v1232
      %v1267 = vpack.c.b16 %v1235, %v1233
      %1300 = vmatprep.subr.bf16.mxu0 %v1251
      %1301 = vmatpush1.bf16.msra.mxu0 %v1250
      %1302 = vmatprep.subr.bf16.mxu0 %v1249
      %1303 = vmatpush1.bf16.msra.mxu0 %v1248
      %1304 = vmatprep.subr.bf16.mxu0 %v1247
      %1305 = vmatpush1.bf16.msra.mxu0 %v1246
      %1306 = vmatprep.subr.bf16.mxu0 %v1245
      %1307 = vmatpush1.bf16.msra.mxu0 %v1244
      %1308 = vmatprep.subr.bf16.mxu0 %v1243
      %1309 = vmatpush1.bf16.msra.mxu0 %v1242
      %1310 = vmatprep.subr.bf16.mxu0 %v1241
      %1311 = vmatpush1.bf16.msra.mxu0 %v1240
      %1312 = vmatprep.subr.bf16.mxu0 %v1239
      %1313 = vmatpush1.bf16.msra.mxu0 %v1238
      %1314 = vmatprep.subr.bf16.mxu0 %v1237
      %1315 = vmatpush1.bf16.msra.mxu0 %v1236
      %1316 = vmatprep.subr.bf16.mxu0 %v1267
      %1317 = vmatpush2.bf16.msra.mxu0 %v1266
      %1318 = vmatprep.subr.bf16.mxu0 %v1265
      %1319 = vmatpush2.bf16.msra.mxu0 %v1264
      %1320 = vmatprep.subr.bf16.mxu0 %v1263
      %1321 = vmatpush2.bf16.msra.mxu0 %v1262
      %1322 = vmatprep.subr.bf16.mxu0 %v1261
      %1323 = vmatpush2.bf16.msra.mxu0 %v1260
      %1324 = vmatprep.subr.bf16.mxu0 %v1259
      %1325 = vmatpush2.bf16.msra.mxu0 %v1258
      %1326 = vmatprep.subr.bf16.mxu0 %v1257
      %1327 = vmatpush2.bf16.msra.mxu0 %v1256
      %1328 = vmatprep.subr.bf16.mxu0 %v1255
      %1329 = vmatpush2.bf16.msra.mxu0 %v1254
      %1330 = vmatprep.subr.bf16.mxu0 %v1253
      %1331 = vmatpush2.bf16.msra.mxu0 %v1252
      %1332 = vmatprep.mubr.bf16.mxu0 %v806
      %1333 = vmatmul.mubr.bf16.gmra.mxu0 %v805
      %v1334 = vpop.f32.mrf.mxu0
      %v1335 = vadd.f32 %v1122, %v1334
      %v1336 = vpop.f32.mrf.mxu0
      %v1337 = vadd.f32 %v1124, %v1336
      %v1338 = vpop.f32.mrf.mxu0
      %v1339 = vadd.f32 %v1126, %v1338
      %v1340 = vpop.f32.mrf.mxu0
      %v1341 = vadd.f32 %v1128, %v1340
      %1342 = vmatprep.mubr.bf16.mxu0 %v808
      %1343 = vmatmul.mubr.bf16.gmra.mxu0 %v807
      %v1344 = vpop.f32.mrf.mxu0
      %v1345 = vadd.f32 %v1132, %v1344
      %v1346 = vpop.f32.mrf.mxu0
      %v1347 = vadd.f32 %v1134, %v1346
      %v1348 = vpop.f32.mrf.mxu0
      %v1349 = vadd.f32 %v1136, %v1348
      %v1350 = vpop.f32.mrf.mxu0
      %v1351 = vadd.f32 %v1138, %v1350
      %1352 = vdwg.mxu0
      %v1353 = vld [vmem:[#allocation3] sm:$0xfc]
      %v1354 = vld [vmem:[#allocation3 + $0x8] sm:$0xfc]
      %v1355 = vld [vmem:[#allocation3 + $0x40] sm:$0x3]
      %v1356 = vld [vmem:[#allocation3 + $0x48] sm:$0x3]
      %v1357 = vpack.c.bf16 %v799, %v1353
      %v1358 = vpack.c.bf16 %v800, %v1354
      %v1359 = vpack.c.bf16 %v1355, %v1355
      %v1360 = vpack.c.bf16 %v1356, %v1356
      %s1361 = scalar_lea.vmem %s4, 512
      %v1362 = vld [vmem:[%s1361] sm:$0xff]
      %v1363 = vld [vmem:[%s1361 + $0x8] sm:$0xff]
      %v1364 = vld [vmem:[%s1361 + $0x10] sm:$0xff]
      %v1365 = vld [vmem:[%s1361 + $0x18] sm:$0xff]
      %v1366 = vld [vmem:[%s1361 + $0x20] sm:$0xff]
      %v1367 = vld [vmem:[%s1361 + $0x28] sm:$0xff]
      %v1368 = vld [vmem:[%s1361 + $0x30] sm:$0xff]
      %v1369 = vld [vmem:[%s1361 + $0x38] sm:$0xff]
      %v1370 = vld [vmem:[%s1361 + $0x40] sm:$0xff]
      %v1371 = vld [vmem:[%s1361 + $0x48] sm:$0xff]
      %v1372 = vld [vmem:[%s1361 + $0x50] sm:$0xff]
      %v1373 = vld [vmem:[%s1361 + $0x58] sm:$0xff]
      %v1374 = vld [vmem:[%s1361 + $0x60] sm:$0xff]
      %v1375 = vld [vmem:[%s1361 + $0x68] sm:$0xff]
      %v1376 = vld [vmem:[%s1361 + $0x70] sm:$0xff]
      %v1377 = vld [vmem:[%s1361 + $0x78] sm:$0xff]
      %v1378 = vld [vmem:[%s1361 + $0x80] sm:$0xff]
      %v1379 = vld [vmem:[%s1361 + $0x88] sm:$0xff]
      %v1380 = vld [vmem:[%s1361 + $0x90] sm:$0xff]
      %v1381 = vld [vmem:[%s1361 + $0x98] sm:$0xff]
      %v1382 = vld [vmem:[%s1361 + $0xa0] sm:$0xff]
      %v1383 = vld [vmem:[%s1361 + $0xa8] sm:$0xff]
      %v1384 = vld [vmem:[%s1361 + $0xb0] sm:$0xff]
      %v1385 = vld [vmem:[%s1361 + $0xb8] sm:$0xff]
      %v1386 = vld [vmem:[%s1361 + $0xc0] sm:$0xff]
      %v1387 = vld [vmem:[%s1361 + $0xc8] sm:$0xff]
      %v1388 = vld [vmem:[%s1361 + $0xd0] sm:$0xff]
      %v1389 = vld [vmem:[%s1361 + $0xd8] sm:$0xff]
      %v1390 = vld [vmem:[%s1361 + $0xe0] sm:$0xff]
      %v1391 = vld [vmem:[%s1361 + $0xe8] sm:$0xff]
      %v1392 = vld [vmem:[%s1361 + $0xf0] sm:$0xff]
      %v1393 = vld [vmem:[%s1361 + $0xf8] sm:$0xff]
      %vm1400 = vcmask 1046528
      %v1401 = vrot.slane %v1357, 1
      %v1402 = vrot.slane %v807, 1
      %v1403 = vsel %vm1400, %v1401, %v1402
      %v1404 = vrot.slane %v1358, 1
      %v1405 = vrot.slane %v808, 1
      %v1406 = vsel %vm1400, %v1404, %v1405
      %v1407 = vrot.slane %v1359, 1
      %v1408 = vsel %vm1400, %v1402, %v1407
      %v1409 = vrot.slane %v1360, 1
      %v1410 = vsel %vm1400, %v1405, %v1409
      %v1447 = vunpack.c.l.b16 %v1362
      %v1448 = vunpack.c.h.b16 %v1362
      %v1449 = vunpack.c.l.b16 %v1363
      %v1450 = vunpack.c.h.b16 %v1363
      %v1451 = vunpack.c.l.b16 %v1364
      %v1452 = vunpack.c.h.b16 %v1364
      %v1453 = vunpack.c.l.b16 %v1365
      %v1454 = vunpack.c.h.b16 %v1365
      %v1455 = vunpack.c.l.b16 %v1366
      %v1456 = vunpack.c.h.b16 %v1366
      %v1457 = vunpack.c.l.b16 %v1367
      %v1458 = vunpack.c.h.b16 %v1367
      %v1459 = vunpack.c.l.b16 %v1368
      %v1460 = vunpack.c.h.b16 %v1368
      %v1461 = vunpack.c.l.b16 %v1369
      %v1462 = vunpack.c.h.b16 %v1369
      %v1463 = vunpack.c.l.b16 %v1370
      %v1464 = vunpack.c.h.b16 %v1370
      %v1465 = vunpack.c.l.b16 %v1371
      %v1466 = vunpack.c.h.b16 %v1371
      %v1467 = vunpack.c.l.b16 %v1372
      %v1468 = vunpack.c.h.b16 %v1372
      %v1469 = vunpack.c.l.b16 %v1373
      %v1470 = vunpack.c.h.b16 %v1373
      %v1471 = vunpack.c.l.b16 %v1374
      %v1472 = vunpack.c.h.b16 %v1374
      %v1473 = vunpack.c.l.b16 %v1375
      %v1474 = vunpack.c.h.b16 %v1375
      %v1475 = vunpack.c.l.b16 %v1376
      %v1476 = vunpack.c.h.b16 %v1376
      %v1477 = vunpack.c.l.b16 %v1377
      %v1478 = vunpack.c.h.b16 %v1377
      %v1479 = vunpack.c.l.b16 %v1378
      %v1480 = vunpack.c.h.b16 %v1378
      %v1481 = vunpack.c.l.b16 %v1379
      %v1482 = vunpack.c.h.b16 %v1379
      %v1483 = vunpack.c.l.b16 %v1380
      %v1484 = vunpack.c.h.b16 %v1380
      %v1485 = vunpack.c.l.b16 %v1381
      %v1486 = vunpack.c.h.b16 %v1381
      %v1487 = vunpack.c.l.b16 %v1382
      %v1488 = vunpack.c.h.b16 %v1382
      %v1489 = vunpack.c.l.b16 %v1383
      %v1490 = vunpack.c.h.b16 %v1383
      %v1491 = vunpack.c.l.b16 %v1384
      %v1492 = vunpack.c.h.b16 %v1384
      %v1493 = vunpack.c.l.b16 %v1385
      %v1494 = vunpack.c.h.b16 %v1385
      %v1495 = vunpack.c.l.b16 %v1386
      %v1496 = vunpack.c.h.b16 %v1386
      %v1497 = vunpack.c.l.b16 %v1387
      %v1498 = vunpack.c.h.b16 %v1387
      %v1499 = vunpack.c.l.b16 %v1388
      %v1500 = vunpack.c.h.b16 %v1388
      %v1501 = vunpack.c.l.b16 %v1389
      %v1502 = vunpack.c.h.b16 %v1389
      %v1503 = vunpack.c.l.b16 %v1390
      %v1504 = vunpack.c.h.b16 %v1390
      %v1505 = vunpack.c.l.b16 %v1391
      %v1506 = vunpack.c.h.b16 %v1391
      %v1507 = vunpack.c.l.b16 %v1392
      %v1508 = vunpack.c.h.b16 %v1392
      %v1509 = vunpack.c.l.b16 %v1393
      %v1510 = vunpack.c.h.b16 %v1393
      %v1511 = vpack.c.b16 %v1449, %v1447
      %v1512 = vpack.c.b16 %v1450, %v1448
      %v1513 = vpack.c.b16 %v1453, %v1451
      %v1514 = vpack.c.b16 %v1454, %v1452
      %v1515 = vpack.c.b16 %v1457, %v1455
      %v1516 = vpack.c.b16 %v1458, %v1456
      %v1517 = vpack.c.b16 %v1461, %v1459
      %v1518 = vpack.c.b16 %v1462, %v1460
      %v1519 = vpack.c.b16 %v1465, %v1463
      %v1520 = vpack.c.b16 %v1466, %v1464
      %v1521 = vpack.c.b16 %v1469, %v1467
      %v1522 = vpack.c.b16 %v1470, %v1468
      %v1523 = vpack.c.b16 %v1473, %v1471
      %v1524 = vpack.c.b16 %v1474, %v1472
      %v1525 = vpack.c.b16 %v1477, %v1475
      %v1526 = vpack.c.b16 %v1478, %v1476
      %v1527 = vpack.c.b16 %v1481, %v1479
      %v1528 = vpack.c.b16 %v1482, %v1480
      %v1529 = vpack.c.b16 %v1485, %v1483
      %v1530 = vpack.c.b16 %v1486, %v1484
      %v1531 = vpack.c.b16 %v1489, %v1487
      %v1532 = vpack.c.b16 %v1490, %v1488
      %v1533 = vpack.c.b16 %v1493, %v1491
      %v1534 = vpack.c.b16 %v1494, %v1492
      %v1535 = vpack.c.b16 %v1497, %v1495
      %v1536 = vpack.c.b16 %v1498, %v1496
      %v1537 = vpack.c.b16 %v1501, %v1499
      %v1538 = vpack.c.b16 %v1502, %v1500
      %v1539 = vpack.c.b16 %v1505, %v1503
      %v1540 = vpack.c.b16 %v1506, %v1504
      %v1541 = vpack.c.b16 %v1509, %v1507
      %v1542 = vpack.c.b16 %v1510, %v1508
      %1575 = vmatprep.subr.bf16.mxu0 %v1526
      %1576 = vmatpush1.bf16.msra.mxu0 %v1525
      %1577 = vmatprep.subr.bf16.mxu0 %v1524
      %1578 = vmatpush1.bf16.msra.mxu0 %v1523
      %1579 = vmatprep.subr.bf16.mxu0 %v1522
      %1580 = vmatpush1.bf16.msra.mxu0 %v1521
      %1581 = vmatprep.subr.bf16.mxu0 %v1520
      %1582 = vmatpush1.bf16.msra.mxu0 %v1519
      %1583 = vmatprep.subr.bf16.mxu0 %v1518
      %1584 = vmatpush1.bf16.msra.mxu0 %v1517
      %1585 = vmatprep.subr.bf16.mxu0 %v1516
      %1586 = vmatpush1.bf16.msra.mxu0 %v1515
      %1587 = vmatprep.subr.bf16.mxu0 %v1514
      %1588 = vmatpush1.bf16.msra.mxu0 %v1513
      %1589 = vmatprep.subr.bf16.mxu0 %v1512
      %1590 = vmatpush1.bf16.msra.mxu0 %v1511
      %1591 = vmatprep.subr.bf16.mxu0 %v1542
      %1592 = vmatpush2.bf16.msra.mxu0 %v1541
      %1593 = vmatprep.subr.bf16.mxu0 %v1540
      %1594 = vmatpush2.bf16.msra.mxu0 %v1539
      %1595 = vmatprep.subr.bf16.mxu0 %v1538
      %1596 = vmatpush2.bf16.msra.mxu0 %v1537
      %1597 = vmatprep.subr.bf16.mxu0 %v1536
      %1598 = vmatpush2.bf16.msra.mxu0 %v1535
      %1599 = vmatprep.subr.bf16.mxu0 %v1534
      %1600 = vmatpush2.bf16.msra.mxu0 %v1533
      %1601 = vmatprep.subr.bf16.mxu0 %v1532
      %1602 = vmatpush2.bf16.msra.mxu0 %v1531
      %1603 = vmatprep.subr.bf16.mxu0 %v1530
      %1604 = vmatpush2.bf16.msra.mxu0 %v1529
      %1605 = vmatprep.subr.bf16.mxu0 %v1528
      %1606 = vmatpush2.bf16.msra.mxu0 %v1527
      %1607 = vmatprep.mubr.bf16.mxu0 %v1406
      %1608 = vmatmul.mubr.bf16.gmra.mxu0 %v1403
      %v1609 = vpop.f32.mrf.mxu0
      %v1610 = vadd.f32 0.0, %v1609
      %v1611 = vpop.f32.mrf.mxu0
      %v1612 = vadd.f32 0.0, %v1611
      %v1613 = vpop.f32.mrf.mxu0
      %v1614 = vadd.f32 0.0, %v1613
      %v1615 = vpop.f32.mrf.mxu0
      %v1616 = vadd.f32 0.0, %v1615
      %1617 = vmatprep.mubr.bf16.mxu0 %v1410
      %1618 = vmatmul.mubr.bf16.gmra.mxu0 %v1408
      %v1619 = vpop.f32.mrf.mxu0
      %v1620 = vadd.f32 0.0, %v1619
      %v1621 = vpop.f32.mrf.mxu0
      %v1622 = vadd.f32 0.0, %v1621
      %v1623 = vpop.f32.mrf.mxu0
      %v1624 = vadd.f32 0.0, %v1623
      %v1625 = vpop.f32.mrf.mxu0
      %v1626 = vadd.f32 0.0, %v1625
      %1627 = vdwg.mxu0
      %v1628 = vadd.f32 %v1335, %v1610
      %v1629 = vadd.f32 %v1337, %v1612
      %v1630 = vadd.f32 %v1339, %v1614
      %v1631 = vadd.f32 %v1341, %v1616
      %v1632 = vadd.f32 %v1345, %v1620
      %v1633 = vadd.f32 %v1347, %v1622
      %v1634 = vadd.f32 %v1349, %v1624
      %v1635 = vadd.f32 %v1351, %v1626
      %v1636 = vld [vmem:[%s5] sm:$0x3]
      %v1638 = vlaneseq
      %v1639 = vshrl.u32 %v1638, 7
      %v1640 = vsub.s32 0, %v1639
      %v1641 = vrot.slane %v1636, %v1640
      %v1642 = vlaneseq
      %v1643 = vshrl.u32 %v1642, 7
      %v1644 = vsub.s32 1, %v1643
      %v1645 = vrot.slane %v1636, %v1644
      %v1648 = vadd.f32 %v1628, %v1641
      %v1649 = vadd.f32 %v1629, %v1645
      %v1650 = vadd.f32 %v1630, %v1641
      %v1651 = vadd.f32 %v1631, %v1645
      %v1652 = vadd.f32 %v1632, %v1641
      %v1653 = vadd.f32 %v1633, %v1645
      %v1654 = vadd.f32 %v1634, %v1641
      %v1655 = vadd.f32 %v1635, %v1645
      %vm1656 = vcmp.gt.f32.partialorder %v1648, 0.0
      %vm1657 = vcmp.gt.f32.partialorder %v1649, 0.0
      %vm1658 = vcmp.gt.f32.partialorder %v1650, 0.0
      %vm1659 = vcmp.gt.f32.partialorder %v1651, 0.0
      %vm1660 = vcmp.gt.f32.partialorder %v1652, 0.0
      %vm1661 = vcmp.gt.f32.partialorder %v1653, 0.0
      %vm1662 = vcmp.gt.f32.partialorder %v1654, 0.0
      %vm1663 = vcmp.gt.f32.partialorder %v1655, 0.0
      %v1664 = vmul.f32 %v1648, 0.2
      %v1665 = vmul.f32 %v1649, 0.2
      %v1666 = vmul.f32 %v1650, 0.2
      %v1667 = vmul.f32 %v1651, 0.2
      %v1668 = vmul.f32 %v1652, 0.2
      %v1669 = vmul.f32 %v1653, 0.2
      %v1670 = vmul.f32 %v1654, 0.2
      %v1671 = vmul.f32 %v1655, 0.2
      %v1672 = vsel %vm1656, %v1648, %v1664
      %v1673 = vsel %vm1657, %v1649, %v1665
      %v1674 = vsel %vm1658, %v1650, %v1666
      %v1675 = vsel %vm1659, %v1651, %v1667
      %v1676 = vsel %vm1660, %v1652, %v1668
      %v1677 = vsel %vm1661, %v1653, %v1669
      %v1678 = vsel %vm1662, %v1654, %v1670
      %v1679 = vsel %vm1663, %v1655, %v1671
      %1680 = vst [vmem:[%s251] sm:$0xff] %v1672
      %1681 = vst [vmem:[%s251 + $0x8] sm:$0xff] %v1673
      %1682 = vst [vmem:[%s251 + $0x10] sm:$0xff] %v1674
      %1683 = vst [vmem:[%s251 + $0x18] sm:$0xff] %v1675
      %1684 = vst [vmem:[%s251 + $0x20] sm:$0xff] %v1676
      %1685 = vst [vmem:[%s251 + $0x28] sm:$0xff] %v1677
      %1686 = vst [vmem:[%s251 + $0x30] sm:$0xff] %v1678
      %1687 = vst [vmem:[%s251 + $0x38] sm:$0xff] %v1679
      %p1688 = scmp.lt.s32.totalorder %s17, 1
      %s1689 = scalar_select %p1688, %s17, 1
      %s1690 = smul.addr %s1689, 8
      %s1691 = smul.addr %s1690, 8
      %s1692 = scalar_lea.vmem %s6, %s1691
      // Predicated region
      $region45: #{generator_block.1} parent=43 // pred_check
        %p1693 = pneg %p166
      $region46: #{generator_block.1} parent=43 // pred_check_branch
        %1695 = sbr.rel (%p1693) target = $region48
      $region47: #{generator_block.1} parent=43 // pred_region
        _
      $region48: #{generator_block.1} parent=43 // pred_fallthru
        _
    $region44: #{generator_block.1} parent=5 // pred_fallthru
      _
    %p1696 = scmp.le.s32.totalorder 2, %s12
    // Predicated region
    $region49: #{generator_block.1} parent=5 // pred_check
      %p1697 = pneg %p1696
    $region50: #{generator_block.1} parent=5 // pred_check_branch
      %1699 = sbr.rel (%p1697) target = $region52
    $region51: #{generator_block.1} parent=5 // pred_region
      %s1700 = ssub.s32 %s12, 2
      // Predicated region
      $region53: #{generator_block.1} parent=51 // pred_check
        %p1701 = pneg %p172
      $region54: #{generator_block.1} parent=51 // pred_check_branch
        %1703 = sbr.rel (%p1701) target = $region56
      $region55: #{generator_block.1} parent=51 // pred_region
        %p1704 = scmp.lt.s32.totalorder %s18, 1
        %s1705 = scalar_select %p1704, %s18, 1
        %s1706 = smul.addr %s1705, 8
        %s1707 = smul.addr %s1706, 8
        %s1708 = scalar_lea.vmem %s6, %s1707
      $region56: #{generator_block.1} parent=51 // pred_fallthru
        _
    $region52: #{generator_block.1} parent=5 // pred_fallthru
      _
  $region6: #{generator_block.1} parent=0 // loop_footer
    %s16 = sadd.s32 1, %s12
  $region7: #{generator_block.1} parent=0 // loop_footer_branch
    %11 = sbr.rel target = $region3
  $region8: #{generator_block.1} parent=0 // loop_exit
    _

</llo_original>
